<compile_context>
chip_gen: v5e
topology: v5e:2x2
jax: 0.10.0
libtpu: 0.0.40
codegen_flags: <defaults>
</compile_context>

<pallas_src>
import jax
import jax.numpy as jnp
from jax import lax
from jax.experimental import pallas as pl
from jax.experimental.pallas import tpu as pltpu


def _tpu_vmem_capacity():
    try:
        info = pltpu.get_tpu_info()
        cap = getattr(info, "vmem_capacity_bytes", None)
        if cap:
            return int(cap)
    except Exception:
        pass
    return 128 * 1024 * 1024


def _chunk_vmem_bytes(t):
    # Per-step working set:
    #   bf16 mask + compare/select intermediates  ~6 B/elem over (TI, TI)
    #   column err block (TI, 128) f32, double-buffered
    #   three (8, TI) f32 row blocks, double-buffered
    #   (2, TI) f32 accumulator + (8, TI) bf16 lhs + margin
    return 6 * t * t + 2 * 512 * t + 3 * 2 * 32 * t + 8 * t + 16 * t + (2 << 20)


def _pick_col_tile(P, vmem_budget):
    """Largest lane-aligned tile that divides P and fits the VMEM budget."""
    best = None
    t = 128
    while t <= min(P, 4096):
        if P % t == 0 and _chunk_vmem_bytes(t) <= vmem_budget:
            best = t
        t += 128
    return best if best is not None else 128


def _lovasz_hinge_kernel(err_cols_ref, labels_cols_ref, labels_rows_ref,
                         err_rows_ref, gts_ref, out_ref, acc_ref):
    # err_cols_ref / labels_cols_ref: (1, 1, TI)  column chunk c (lane-oriented)
    # labels_rows_ref:                (1, 1, TI)  row chunk r (lane-oriented)
    # err_rows_ref:                   (1, TI, 1)  row chunk r (sublane-oriented)
    # gts_ref:                        (1, 1, 128) per-image #gt pixels
    # out_ref:                        (1, 1, 8, 128) partial loss of chunk c
    # acc_ref:                        (2, TI) f32: row 0 = s_gt, row 1 = s_ngt
    c = pl.program_id(1)
    r = pl.program_id(2)
    n_r = pl.num_programs(2)
    TI = acc_ref.shape[1]

    @pl.when(r == 0)
    def _init():
        acc_ref[...] = jnp.zeros_like(acc_ref)

    e_cols = err_cols_ref[0]          # (1, TI)  errors of columns i
    e_rows = err_rows_ref[0]          # (TI, 1)  errors of rows j (same values, column layout)
    t_rows = labels_rows_ref[0]       # (1, TI)  labels of rows j

    # MXU reduction LHS: row 0 = labels[j], row 1 = 1 - labels[j], rows 2..7 = 0.
    ridx = lax.broadcasted_iota(jnp.int32, (8, TI), 0)
    t8 = jnp.broadcast_to(t_rows, (8, TI))
    lhs = jnp.where(ridx == 0, t8,
                    jnp.where(ridx == 1, 1.0 - t8, 0.0)).astype(jnp.bfloat16)

    def _accumulate(mask):
        red = jnp.dot(lhs, mask.astype(jnp.bfloat16),
                      preferred_element_type=jnp.float32)          # (8, TI)
        acc_ref[...] += red[0:2, :]                                # only live rows

    # 3-region tie-break split.  r/c are scalars, so exactly one branch runs
    # per grid step; outside the diagonal band the index tie-break is constant
    # and a single compare per (j, i) element suffices.  The diagonal of the
    # band is already 0 (equal errors, equal index) — no extra guard.
    @pl.when(r < c)       # every row j precedes every column i -> ties count
    def _above():
        _accumulate(e_rows >= e_cols)

    @pl.when(r > c)       # every row j follows every column i -> ties don't count
    def _below():
        _accumulate(e_rows > e_cols)

    @pl.when(r == c)      # diagonal band: stable tie-break on the local index
    def _band():
        jl = lax.broadcasted_iota(jnp.int32, (TI, 1), 0)
        il = lax.broadcasted_iota(jnp.int32, (1, TI), 1)
        _accumulate((e_rows > e_cols) | ((e_rows == e_cols) & (jl < il)))

    @pl.when(r == n_r - 1)
    def _finalize():
        gts = gts_ref[0, :, 0:1]                 # (1, 1) total #gt pixels
        t_i = labels_cols_ref[0]                 # (1, TI)
        e_i = err_cols_ref[0]                    # (1, TI)
        s_gt = acc_ref[0:1, :]                   # (1, TI) #gt strictly before i
        s_ngt = acc_ref[1:2, :]                  # (1, TI) #non-gt strictly before i

        # Inclusive cumulative counts at i's sorted position.
        cum_gt = s_gt + t_i
        cum_ngt = s_ngt + (1.0 - t_i)
        union = gts + cum_ngt                    # >= 1 always
        jac = 1.0 - (gts - cum_gt) / union

        # Jaccard at the previous sorted position (exclusive counts).  At rank
        # 0 with gts == 0 the formula is 0/0; the reference's grad[0] = jac[0]
        # means the predecessor jaccard must be 0 there.
        union_p = gts + s_ngt
        jac_p = jnp.where(union_p > 0.0,
                          1.0 - (gts - s_gt) / jnp.maximum(union_p, 1.0),
                          0.0)
        grad = jac - jac_p

        partial = jnp.sum(jnp.maximum(e_i, 0.0) * grad)
        out_ref[...] = jnp.broadcast_to(partial, out_ref.shape).astype(out_ref.dtype)


def lovasz_hinge_loss(inputs, targets, *, col_tile=None):
    """inputs, targets: (B, 1, H, W) NCHW. Returns scalar mean per-image loss."""
    B, C, H, W = inputs.shape
    assert C == 1, "LovaszHingeLoss squeezes a single channel"
    P = H * W
    assert P % 128 == 0, "H*W must be lane-aligned"  # TODO(synk): pad/mask ragged H*W

    cap = _tpu_vmem_capacity()
    budget = int(cap * 0.82)          # headroom: ~52 MiB on v7x, ~105 MiB on v5e/v6e
    TI = col_tile or _pick_col_tile(P, budget)
    assert P % TI == 0 and TI % 128 == 0
    n_chunks = P // TI

    logits = inputs.reshape(B, P).astype(jnp.float32)
    labels = targets.reshape(B, P).astype(jnp.float32)

    # Hinge errors computed ONCE here; both kernel layouts below are reshapes
    # of the exact same f32 values, so in-kernel tie comparisons are bitwise
    # consistent regardless of FMA contraction choices.
    errors = 1.0 - logits * (2.0 * labels - 1.0)
    gts = jnp.sum(labels, axis=1)

    err_r = errors.reshape(B, 1, P)
    err_c = errors.reshape(B, P, 1)   # streamed in (TI, 1) blocks by the grid
    labels_r = labels.reshape(B, 1, P)
    gts_arr = jnp.broadcast_to(gts.reshape(B, 1, 1), (B, 1, 128)).astype(jnp.float32)

    vmem_limit = int(min(max(_chunk_vmem_bytes(TI), 32 * 1024 * 1024), budget))

    out = pl.pallas_call(
        _lovasz_hinge_kernel,
        out_shape=jax.ShapeDtypeStruct((B, n_chunks, 8, 128), jnp.float32),
        grid_spec=pltpu.PrefetchScalarGridSpec(
            num_scalar_prefetch=0,
            # (batch, column chunk, row chunk); row chunk is the reduction.
            grid=(B, n_chunks, n_chunks),
            in_specs=[
                pl.BlockSpec((1, 1, TI), lambda b, c, r: (b, 0, c)),   # err, columns
                pl.BlockSpec((1, 1, TI), lambda b, c, r: (b, 0, c)),   # labels, columns
                pl.BlockSpec((1, 1, TI), lambda b, c, r: (b, 0, r)),   # labels, rows
                pl.BlockSpec((1, TI, 1), lambda b, c, r: (b, r, 0)),   # err, rows (column layout)
                pl.BlockSpec((1, 1, 128), lambda b, c, r: (b, 0, 0)),  # gts
            ],
            out_specs=pl.BlockSpec((1, 1, 8, 128), lambda b, c, r: (b, c, 0, 0)),
            scratch_shapes=[pltpu.VMEM((2, TI), jnp.float32)],
        ),
        compiler_params=pltpu.CompilerParams(
            # batch and column chunks are independent -> megacore split on v7x
            # even at B == 1; the row-chunk accumulation axis stays arbitrary.
            dimension_semantics=("parallel", "parallel", "arbitrary"),
            vmem_limit_bytes=vmem_limit,
        ),
    )(err_r, labels_r, labels_r, err_c, gts_arr)

    per_image = jnp.sum(out[:, :, 0, 0], axis=1)   # sum of per-chunk partials
    return jnp.mean(per_image)


def _lovasz_hinge_ref(inputs, targets):
    """Pure-JAX reference (mirrors the PyTorch lovasz_hinge, per_image=True)."""
    def per_img(lg, lb):
        lg = lg.reshape(-1).astype(jnp.float32)
        lb = lb.reshape(-1).astype(jnp.float32)
        signs = 2.0 * lb - 1.0
        errors = 1.0 - lg * signs
        order = jnp.argsort(-errors)            # stable descending on errors
        errors_sorted = errors[order]
        gt_sorted = lb[order]
        gts = gt_sorted.sum()
        intersection = gts - jnp.cumsum(gt_sorted)
        union = gts + jnp.cumsum(1.0 - gt_sorted)
        jac = 1.0 - intersection / union
        grad = jnp.concatenate([jac[:1], jac[1:] - jac[:-1]])
        return jnp.dot(jnp.maximum(errors_sorted, 0.0), grad)
    return jnp.mean(jax.vmap(per_img)(inputs[:, 0], targets[:, 0]))


if __name__ == "__main__":
    key = jax.random.PRNGKey(0)
    k1, k2 = jax.random.split(key)
    B, C, H, W = 2, 1, 16, 16
    x = jax.random.normal(k1, (B, C, H, W), dtype=jnp.float32)            # logits
    t = jax.random.bernoulli(k2, 0.4, (B, C, H, W)).astype(jnp.float32)   # binary labels

    ref = jax.block_until_ready(_lovasz_hinge_ref(x, t))

    # Default (budget-driven) tile: single chunk at this size.
    loss = jax.block_until_ready(lovasz_hinge_loss(x, t))
    assert jnp.allclose(loss, ref, rtol=1e-4, atol=1e-4), (loss, ref)

    # Forced 128-wide tile: exercises the multi-chunk grid, the r<c / r>c /
    # r==c mask regions and the cross-chunk accumulation.
    loss_mc = jax.block_until_ready(lovasz_hinge_loss(x, t, col_tile=128))
    assert jnp.allclose(loss_mc, ref, rtol=1e-4, atol=1e-4), (loss_mc, ref)

    # Edge case: an all-negative label map (gts == 0) must not produce NaN.
    t0 = jnp.zeros_like(t)
    ref0 = jax.block_until_ready(_lovasz_hinge_ref(x, t0))
    loss0 = jax.block_until_ready(lovasz_hinge_loss(x, t0, col_tile=128))
    assert jnp.allclose(loss0, ref0, rtol=1e-4, atol=1e-4), (loss0, ref0)

    print("KERNEL_OK")
</pallas_src>

<mosaic_0001>
module attributes {stable_mosaic.version = 11 : i64} {
  func.func @_lovasz_hinge_kernel(%arg0: i32, %arg1: i32, %arg2: i32, %arg3: memref<1x1x256xf32, #tpu.memory_space<vmem>>, %arg4: memref<1x1x256xf32, #tpu.memory_space<vmem>>, %arg5: memref<1x1x256xf32, #tpu.memory_space<vmem>>, %arg6: memref<1x256x1xf32, #tpu.memory_space<vmem>>, %arg7: memref<1x1x128xf32, #tpu.memory_space<vmem>>, %arg8: memref<1x1x8x128xf32, #tpu.memory_space<vmem>>, %arg9: memref<2x256xf32, #tpu.memory_space<vmem>>) attributes {dimension_semantics = [#tpu.dimension_semantics<parallel>, #tpu.dimension_semantics<parallel>, #tpu.dimension_semantics<arbitrary>], iteration_bounds = array<i64: 2, 1, 1>, scalar_prefetch = 0 : i64, scratch_operands = 1 : i64, tpu.core_type = #tpu.core_type<tc>, window_params = [{transform_indices = @transform_0, window_bounds = array<i64: 1, 1, 256>}, {transform_indices = @transform_1, window_bounds = array<i64: 1, 1, 256>}, {transform_indices = @transform_2, window_bounds = array<i64: 1, 1, 256>}, {transform_indices = @transform_3, window_bounds = array<i64: 1, 256, 1>}, {transform_indices = @transform_4, window_bounds = array<i64: 1, 1, 128>}, {transform_indices = @transform_5, window_bounds = array<i64: 1, 1, 8, 128>}]} {
    %c0_i32 = arith.constant 0 : i32
    %0 = arith.cmpi eq, %arg2, %c0_i32 : i32
    %1 = arith.extui %0 : i1 to i32
    %c0_i32_0 = arith.constant 0 : i32
    %2 = arith.cmpi ne, %1, %c0_i32_0 : i32
    scf.if %2 {
      %cst_16 = arith.constant 0.000000e+00 : f32
      %34 = vector.broadcast %cst_16 : f32 to vector<2x256xf32>
      %c0_17 = arith.constant 0 : index
      %c0_18 = arith.constant 0 : index
      %35 = vector.load %arg9[%c0_17, %c0_18] : memref<2x256xf32, #tpu.memory_space<vmem>>, vector<2x256xf32>
      tpu.vector_store %arg9[%c0_17, %c0_18], %34 {strides = array<i32>} : memref<2x256xf32, #tpu.memory_space<vmem>>, vector<2x256xf32>,
    } else {
    }
    %c0 = arith.constant 0 : index
    %c0_1 = arith.constant 0 : index
    %c0_2 = arith.constant 0 : index
    %3 = vector.load %arg3[%c0, %c0_1, %c0_2] : memref<1x1x256xf32, #tpu.memory_space<vmem>>, vector<1x1x256xf32>
    %4 = vector.shape_cast %3 : vector<1x1x256xf32> to vector<1x256xf32>
    %c0_3 = arith.constant 0 : index
    %c0_4 = arith.constant 0 : index
    %c0_5 = arith.constant 0 : index
    %5 = vector.load %arg6[%c0_3, %c0_4, %c0_5] : memref<1x256x1xf32, #tpu.memory_space<vmem>>, vector<1x256x1xf32>
    %6 = vector.shape_cast %5 : vector<1x256x1xf32> to vector<256x1xf32>
    %c0_6 = arith.constant 0 : index
    %c0_7 = arith.constant 0 : index
    %c0_8 = arith.constant 0 : index
    %7 = vector.load %arg5[%c0_6, %c0_7, %c0_8] : memref<1x1x256xf32, #tpu.memory_space<vmem>>, vector<1x1x256xf32>
    %8 = vector.shape_cast %7 : vector<1x1x256xf32> to vector<1x256xf32>
    %9 = tpu.iota {dimensions = array<i32: 0>} : vector<8x256xi32>
    %10 = vector.shape_cast %8 : vector<1x256xf32> to vector<1x256xf32>
    %11 = vector.broadcast %10 : vector<1x256xf32> to vector<8x256xf32>
    %c0_i32_9 = arith.constant 0 : i32
    %12 = vector.broadcast %c0_i32_9 : i32 to vector<8x256xi32>
    %13 = arith.cmpi eq, %9, %12 : vector<8x256xi32>
    %c1_i32 = arith.constant 1 : i32
    %14 = vector.broadcast %c1_i32 : i32 to vector<8x256xi32>
    %15 = arith.cmpi eq, %9, %14 : vector<8x256xi32>
    %cst = arith.constant 1.000000e+00 : f32
    %16 = vector.broadcast %cst : f32 to vector<8x256xf32>
    %17 = arith.subf %16, %11 : vector<8x256xf32>
    %cst_10 = arith.constant 0.000000e+00 : f32
    %18 = vector.broadcast %cst_10 : f32 to vector<8x256xf32>
    %19 = arith.select %15, %17, %18 : vector<8x256xi1>, vector<8x256xf32>
    %20 = arith.select %13, %11, %19 : vector<8x256xi1>, vector<8x256xf32>
    %21 = arith.truncf %20 : vector<8x256xf32> to vector<8x256xbf16>
    %22 = arith.cmpi slt, %arg2, %arg1 : i32
    %23 = arith.extui %22 : i1 to i32
    %c0_i32_11 = arith.constant 0 : i32
    %24 = arith.cmpi ne, %23, %c0_i32_11 : i32
    scf.if %24 {
      %34 = vector.broadcast %6 : vector<256x1xf32> to vector<256x256xf32>
      %35 = vector.broadcast %4 : vector<1x256xf32> to vector<256x256xf32>
      %36 = arith.cmpf oge, %34, %35 : vector<256x256xf32>
      %37 = arith.extui %36 : vector<256x256xi1> to vector<256x256xi32>
      %38 = arith.sitofp %37 : vector<256x256xi32> to vector<256x256xf32>
      %39 = arith.truncf %38 : vector<256x256xf32> to vector<256x256xbf16>
      %cst_16 = arith.constant dense<0.000000e+00> : vector<8x256xf32>
      %40 = tpu.matmul %21, %39, %cst_16 {dimension_numbers = #tpu.dot_dimension_numbers<[1], [0], [0], [1], [0, 0, 1, 1], [], []>} : vector<8x256xbf16>, vector<256x256xbf16>, vector<8x256xf32> -> vector<8x256xf32>
      %c0_17 = arith.constant 0 : index
      %c0_18 = arith.constant 0 : index
      %41 = vector.load %arg9[%c0_17, %c0_18] : memref<2x256xf32, #tpu.memory_space<vmem>>, vector<2x256xf32>
      %42 = vector.extract_strided_slice %40 {offsets = [0, 0], sizes = [2, 256], strides = [1, 1]} : vector<8x256xf32> to vector<2x256xf32>
      %43 = arith.addf %41, %42 : vector<2x256xf32>
      %c0_19 = arith.constant 0 : index
      %c0_20 = arith.constant 0 : index
      %44 = vector.load %arg9[%c0_19, %c0_20] : memref<2x256xf32, #tpu.memory_space<vmem>>, vector<2x256xf32>
      tpu.vector_store %arg9[%c0_19, %c0_20], %43 {strides = array<i32>} : memref<2x256xf32, #tpu.memory_space<vmem>>, vector<2x256xf32>,
    } else {
    }
    %25 = arith.cmpi sgt, %arg2, %arg1 : i32
    %26 = arith.extui %25 : i1 to i32
    %c0_i32_12 = arith.constant 0 : i32
    %27 = arith.cmpi ne, %26, %c0_i32_12 : i32
    scf.if %27 {
      %34 = vector.broadcast %6 : vector<256x1xf32> to vector<256x256xf32>
      %35 = vector.broadcast %4 : vector<1x256xf32> to vector<256x256xf32>
      %36 = arith.cmpf ogt, %34, %35 : vector<256x256xf32>
      %37 = arith.extui %36 : vector<256x256xi1> to vector<256x256xi32>
      %38 = arith.sitofp %37 : vector<256x256xi32> to vector<256x256xf32>
      %39 = arith.truncf %38 : vector<256x256xf32> to vector<256x256xbf16>
      %cst_16 = arith.constant dense<0.000000e+00> : vector<8x256xf32>
      %40 = tpu.matmul %21, %39, %cst_16 {dimension_numbers = #tpu.dot_dimension_numbers<[1], [0], [0], [1], [0, 0, 1, 1], [], []>} : vector<8x256xbf16>, vector<256x256xbf16>, vector<8x256xf32> -> vector<8x256xf32>
      %c0_17 = arith.constant 0 : index
      %c0_18 = arith.constant 0 : index
      %41 = vector.load %arg9[%c0_17, %c0_18] : memref<2x256xf32, #tpu.memory_space<vmem>>, vector<2x256xf32>
      %42 = vector.extract_strided_slice %40 {offsets = [0, 0], sizes = [2, 256], strides = [1, 1]} : vector<8x256xf32> to vector<2x256xf32>
      %43 = arith.addf %41, %42 : vector<2x256xf32>
      %c0_19 = arith.constant 0 : index
      %c0_20 = arith.constant 0 : index
      %44 = vector.load %arg9[%c0_19, %c0_20] : memref<2x256xf32, #tpu.memory_space<vmem>>, vector<2x256xf32>
      tpu.vector_store %arg9[%c0_19, %c0_20], %43 {strides = array<i32>} : memref<2x256xf32, #tpu.memory_space<vmem>>, vector<2x256xf32>,
    } else {
    }
    %28 = arith.cmpi eq, %arg2, %arg1 : i32
    %29 = arith.extui %28 : i1 to i32
    %c0_i32_13 = arith.constant 0 : i32
    %30 = arith.cmpi ne, %29, %c0_i32_13 : i32
    scf.if %30 {
      %34 = tpu.iota {dimensions = array<i32: 0>} : vector<256x1xi32>
      %35 = tpu.iota {dimensions = array<i32: 1>} : vector<1x256xi32>
      %36 = vector.broadcast %6 : vector<256x1xf32> to vector<256x256xf32>
      %37 = vector.broadcast %4 : vector<1x256xf32> to vector<256x256xf32>
      %38 = arith.cmpf ogt, %36, %37 : vector<256x256xf32>
      %39 = vector.broadcast %6 : vector<256x1xf32> to vector<256x256xf32>
      %40 = vector.broadcast %4 : vector<1x256xf32> to vector<256x256xf32>
      %41 = arith.cmpf oeq, %39, %40 : vector<256x256xf32>
      %42 = vector.broadcast %34 : vector<256x1xi32> to vector<256x256xi32>
      %43 = vector.broadcast %35 : vector<1x256xi32> to vector<256x256xi32>
      %44 = arith.cmpi slt, %42, %43 : vector<256x256xi32>
      %45 = arith.andi %41, %44 : vector<256x256xi1>
      %46 = arith.ori %38, %45 : vector<256x256xi1>
      %47 = arith.extui %46 : vector<256x256xi1> to vector<256x256xi32>
      %48 = arith.sitofp %47 : vector<256x256xi32> to vector<256x256xf32>
      %49 = arith.truncf %48 : vector<256x256xf32> to vector<256x256xbf16>
      %cst_16 = arith.constant dense<0.000000e+00> : vector<8x256xf32>
      %50 = tpu.matmul %21, %49, %cst_16 {dimension_numbers = #tpu.dot_dimension_numbers<[1], [0], [0], [1], [0, 0, 1, 1], [], []>} : vector<8x256xbf16>, vector<256x256xbf16>, vector<8x256xf32> -> vector<8x256xf32>
      %c0_17 = arith.constant 0 : index
      %c0_18 = arith.constant 0 : index
      %51 = vector.load %arg9[%c0_17, %c0_18] : memref<2x256xf32, #tpu.memory_space<vmem>>, vector<2x256xf32>
      %52 = vector.extract_strided_slice %50 {offsets = [0, 0], sizes = [2, 256], strides = [1, 1]} : vector<8x256xf32> to vector<2x256xf32>
      %53 = arith.addf %51, %52 : vector<2x256xf32>
      %c0_19 = arith.constant 0 : index
      %c0_20 = arith.constant 0 : index
      %54 = vector.load %arg9[%c0_19, %c0_20] : memref<2x256xf32, #tpu.memory_space<vmem>>, vector<2x256xf32>
      tpu.vector_store %arg9[%c0_19, %c0_20], %53 {strides = array<i32>} : memref<2x256xf32, #tpu.memory_space<vmem>>, vector<2x256xf32>,
    } else {
    }
    %c0_i32_14 = arith.constant 0 : i32
    %31 = arith.cmpi eq, %arg2, %c0_i32_14 : i32
    %32 = arith.extui %31 : i1 to i32
    %c0_i32_15 = arith.constant 0 : i32
    %33 = arith.cmpi ne, %32, %c0_i32_15 : i32
    scf.if %33 {
      %c0_16 = arith.constant 0 : index
      %c0_17 = arith.constant 0 : index
      %c0_18 = arith.constant 0 : index
      %34 = vector.load %arg7[%c0_16, %c0_17, %c0_18] : memref<1x1x128xf32, #tpu.memory_space<vmem>>, vector<1x1x1xf32>
      %35 = vector.shape_cast %34 : vector<1x1x1xf32> to vector<1x1xf32>
      %c0_19 = arith.constant 0 : index
      %c0_20 = arith.constant 0 : index
      %c0_21 = arith.constant 0 : index
      %36 = vector.load %arg4[%c0_19, %c0_20, %c0_21] : memref<1x1x256xf32, #tpu.memory_space<vmem>>, vector<1x1x256xf32>
      %37 = vector.shape_cast %36 : vector<1x1x256xf32> to vector<1x256xf32>
      %c0_22 = arith.constant 0 : index
      %c0_23 = arith.constant 0 : index
      %c0_24 = arith.constant 0 : index
      %38 = vector.load %arg3[%c0_22, %c0_23, %c0_24] : memref<1x1x256xf32, #tpu.memory_space<vmem>>, vector<1x1x256xf32>
      %39 = vector.shape_cast %38 : vector<1x1x256xf32> to vector<1x256xf32>
      %c0_25 = arith.constant 0 : index
      %c0_26 = arith.constant 0 : index
      %40 = vector.load %arg9[%c0_25, %c0_26] : memref<2x256xf32, #tpu.memory_space<vmem>>, vector<1x256xf32>
      %c1 = arith.constant 1 : index
      %c0_27 = arith.constant 0 : index
      %41 = vector.load %arg9[%c1, %c0_27] : memref<2x256xf32, #tpu.memory_space<vmem>>, vector<1x256xf32>
      %42 = arith.addf %40, %37 : vector<1x256xf32>
      %cst_28 = arith.constant 1.000000e+00 : f32
      %43 = vector.broadcast %cst_28 : f32 to vector<1x256xf32>
      %44 = arith.subf %43, %37 : vector<1x256xf32>
      %45 = arith.addf %41, %44 : vector<1x256xf32>
      %46 = vector.broadcast %35 : vector<1x1xf32> to vector<1x256xf32>
      %47 = arith.addf %46, %45 : vector<1x256xf32>
      %48 = vector.broadcast %35 : vector<1x1xf32> to vector<1x256xf32>
      %49 = arith.subf %48, %42 : vector<1x256xf32>
      %50 = arith.divf %49, %47 : vector<1x256xf32>
      %cst_29 = arith.constant 1.000000e+00 : f32
      %51 = vector.broadcast %cst_29 : f32 to vector<1x256xf32>
      %52 = arith.subf %51, %50 : vector<1x256xf32>
      %53 = vector.broadcast %35 : vector<1x1xf32> to vector<1x256xf32>
      %54 = arith.addf %53, %41 : vector<1x256xf32>
      %cst_30 = arith.constant 0.000000e+00 : f32
      %55 = vector.broadcast %cst_30 : f32 to vector<1x256xf32>
      %56 = arith.cmpf ogt, %54, %55 : vector<1x256xf32>
      %57 = vector.broadcast %35 : vector<1x1xf32> to vector<1x256xf32>
      %58 = arith.subf %57, %40 : vector<1x256xf32>
      %cst_31 = arith.constant 1.000000e+00 : f32
      %59 = vector.broadcast %cst_31 : f32 to vector<1x256xf32>
      %60 = arith.maximumf %54, %59 : vector<1x256xf32>
      %61 = arith.divf %58, %60 : vector<1x256xf32>
      %cst_32 = arith.constant 1.000000e+00 : f32
      %62 = vector.broadcast %cst_32 : f32 to vector<1x256xf32>
      %63 = arith.subf %62, %61 : vector<1x256xf32>
      %cst_33 = arith.constant 0.000000e+00 : f32
      %64 = vector.broadcast %cst_33 : f32 to vector<1x256xf32>
      %65 = arith.select %56, %63, %64 : vector<1x256xi1>, vector<1x256xf32>
      %66 = arith.subf %52, %65 : vector<1x256xf32>
      %cst_34 = arith.constant 0.000000e+00 : f32
      %67 = vector.broadcast %cst_34 : f32 to vector<1x256xf32>
      %68 = arith.maximumf %39, %67 : vector<1x256xf32>
      %69 = arith.mulf %68, %66 : vector<1x256xf32>
      %70 = vector.shape_cast %69 : vector<1x256xf32> to vector<1x1x256xf32>
      %cst_35 = arith.constant dense<0.000000e+00> : vector<1xf32>
      %71 = vector.multi_reduction <add>, %70, %cst_35 [1, 2] : vector<1x1x256xf32> to vector<1xf32>
      %72 = vector.shape_cast %71 : vector<1xf32> to vector<1x1x1xf32>
      %73 = vector.extract %72[0, 0, 0] : f32 from vector<1x1x1xf32>
      %74 = vector.broadcast %73 : f32 to vector<1x1x8x128xf32>
      %c0_36 = arith.constant 0 : index
      %c0_37 = arith.constant 0 : index
      %c0_38 = arith.constant 0 : index
      %c0_39 = arith.constant 0 : index
      %75 = vector.load %arg8[%c0_36, %c0_37, %c0_38, %c0_39] : memref<1x1x8x128xf32, #tpu.memory_space<vmem>>, vector<1x1x8x128xf32>
      tpu.vector_store %arg8[%c0_36, %c0_37, %c0_38, %c0_39], %74 {strides = array<i32>} : memref<1x1x8x128xf32, #tpu.memory_space<vmem>>, vector<1x1x8x128xf32>,
    } else {
    }
    return
  }
  func.func @transform_0(%arg0: i32, %arg1: i32, %arg2: i32) -> (i32, i32, i32) {
    %c0_i32 = arith.constant 0 : i32
    %c0_i32_0 = arith.constant 0 : i32
    return %arg0, %c0_i32, %arg1 : i32, i32, i32
  }
  func.func @transform_1(%arg0: i32, %arg1: i32, %arg2: i32) -> (i32, i32, i32) {
    %c0_i32 = arith.constant 0 : i32
    %c0_i32_0 = arith.constant 0 : i32
    return %arg0, %c0_i32, %arg1 : i32, i32, i32
  }
  func.func @transform_2(%arg0: i32, %arg1: i32, %arg2: i32) -> (i32, i32, i32) {
    %c0_i32 = arith.constant 0 : i32
    %c0_i32_0 = arith.constant 0 : i32
    return %arg0, %c0_i32, %arg2 : i32, i32, i32
  }
  func.func @transform_3(%arg0: i32, %arg1: i32, %arg2: i32) -> (i32, i32, i32) {
    %c0_i32 = arith.constant 0 : i32
    %c0_i32_0 = arith.constant 0 : i32
    return %arg0, %arg2, %c0_i32 : i32, i32, i32
  }
  func.func @transform_4(%arg0: i32, %arg1: i32, %arg2: i32) -> (i32, i32, i32) {
    %c0_i32 = arith.constant 0 : i32
    %c0_i32_0 = arith.constant 0 : i32
    %c0_i32_1 = arith.constant 0 : i32
    return %arg0, %c0_i32, %c0_i32_0 : i32, i32, i32
  }
  func.func @transform_5(%arg0: i32, %arg1: i32, %arg2: i32) -> (i32, i32, i32, i32) {
    %c0_i32 = arith.constant 0 : i32
    %c0_i32_0 = arith.constant 0 : i32
    %c0_i32_1 = arith.constant 0 : i32
    return %arg0, %arg1, %c0_i32, %c0_i32_0 : i32, i32, i32, i32
  }
}

</mosaic_0001>

<llo_original>
// kernel: tpu_custom_call.1
$region0: #{tpu_custom_call.1}
  #allocation0 [shape = 'u32[]', space=smem, size = 0x4, offset = 0x4, fixed_abs, tag = 'smem constant byte address 0x4 - core index']
  #allocation1 [shape = 'u32[72,128]{1,0:T(1,128)}', space=vmem, size = 0x9000, scoped, tag = 'internal scratch']
  #allocation2 [shape = 'f32[2,256]{1,0:T(2,128)}', space=vmem, size = 0x800, scoped, tag = 'scratch operand']
  %s0 = inlined_call_operand.vmem [shape: f32[2,1,256], index: 0, kind: input, shape index: {}]
  %s1 = inlined_call_operand.vmem [shape: f32[2,1,256], index: 1, kind: input, shape index: {}]
  %s2 = inlined_call_operand.vmem [shape: f32[2,1,256], index: 2, kind: input, shape index: {}]
  %s3 = inlined_call_operand.vmem [shape: f32[2,256,1], index: 3, kind: input, shape index: {}]
  %s4 = inlined_call_operand.vmem [shape: f32[2,1,128], index: 4, kind: input, shape index: {}]
  %s5 = inlined_call_operand.hbm [shape: f32[2,1,8,128], index: 5, kind: output, shape index: {}]
  %s6 = sld [smem:[#allocation0]]
  $region73: #{tpu_custom_call.1} parent=0
    _
  %s8 = ssub.s32 1, %s6
  %s9 = scalar_select 0, %s8, %s6
  $region1: #{tpu_custom_call.1} parent=0
    #allocation3 [shape = 'u8[8192]{0}', space=vmem, size = 0x2000, scoped, tag = 'output window, operand 0']
    #allocation4 [shape = 's32[2]{0}', space=sflag, size = 0x8, scoped, tag = 'scoped memory for tpu_custom_call.1']
    %10 = vsyncpa [#allocation4], 0
    %s11 = scalar_lea.sflag [#allocation4], 1
    %12 = vsyncpa %s11, 0
    loop: start=0, step=1, limit=4
    $region2: #{tpu_custom_call.1} parent=1 // loop_pre_header
      _
    $region3: #{tpu_custom_call.1} parent=1 // loop_header
      %s14 = sphi 0, %s18
      %p15 = scmp.ge.s32.totalorder %s14, 4
      %s21 = sphi 0, %s40
      %s22 = sphi 0, %s36
      %s23 = sphi 0, %s32
      %s24 = sphi 0, %s21
      %s25 = sphi 0, %s22
      %s26 = sphi 0, %s23
      %s27 = sphi 0, %s24
      %s28 = sphi 0, %s25
      %s29 = sphi 0, %s26
      %s45 = sphi 0, %s47
      %s48 = sphi 0, %s45
      %s49 = sphi 0, %s48
      %s65 = sphi 0, %s49
      %s73 = sphi 0, %s75
      %s76 = sphi 0, %s73
      %s77 = sphi 0, %s76
      %s93 = sphi 0, %s77
      %s101 = sphi 0, %s103
      %s104 = sphi 0, %s101
      %s105 = sphi 0, %s104
      %s121 = sphi 0, %s105
      %s129 = sphi 0, %s131
      %s132 = sphi 0, %s129
      %s133 = sphi 0, %s132
      %s149 = sphi 0, %s133
      %s155 = sphi 0, %s157
      %s158 = sphi 0, %s155
      %s159 = sphi 0, %s158
      %s175 = sphi 0, %s159
      %s183 = sphi 0, %s185
      %s186 = sphi 0, %s183
      %s187 = sphi 0, %s186
      %s203 = sphi 0, %s187
    $region4: #{tpu_custom_call.1} parent=1 // loop_header_branch
      %17 = sbr.rel (%p15) target = $region8
    $region5: #{tpu_custom_call.1} parent=1 // loop_body
      %s19 = ssub.s32 %s14, 1
      %s20 = ssub.s32 %s14, 2
      %s30 = sadd.s32 1, %s23
      %p31 = scmp.ge.s32.totalorder %s30, 1
      %s32 = scalar_select %p31, 0, %s30
      %s33 = sadd.s32 1, %s22
      %s34 = scalar_select %p31, %s33, %s22
      %p35 = scmp.ge.s32.totalorder %s34, 1
      %s36 = scalar_select %p35, 0, %s34
      %s37 = sadd.s32 1, %s21
      %s38 = scalar_select %p35, %s37, %s21
      %p39 = scmp.ge.s32.totalorder %s38, 2
      %s40 = scalar_select %p39, 0, %s38
      %s41 = ssub.s32 %s21, %s40
      %s42 = ssub.s32 %s22, %s36
      %s43 = sor.u32 %s41, %s42
      %p44 = scmp.eq.s32.totalorder %s43, 0
      %s46 = sadd.s32 %s45, 1
      %s47 = scalar_select %p44, %s45, %s46
      %p50 = pneg %p44
      %p51 = scmp.eq.s32.totalorder %s14, 1
      %p52 = por %p50, %p51
      %p53 = scmp.ne.s32.totalorder %s45, %s48
      %p54 = scmp.eq.s32.totalorder %s14, 0
      %p55 = por %p53, %p54
      %p56 = scmp.ne.s32.totalorder %s45, %s48
      %p57 = scmp.eq.s32.totalorder %s19, 1
      %p58 = por %p56, %p57
      %p59 = scmp.ne.s32.totalorder %s48, %s49
      %p60 = scmp.eq.s32.totalorder %s19, 0
      %p61 = por %p59, %p60
      %p62 = scmp.ne.s32.totalorder %s48, %s49
      %p63 = scmp.eq.s32.totalorder %s20, 1
      %p64 = por %p62, %p63
      %p66 = scmp.ne.s32.totalorder %s49, %s65
      %p67 = scmp.eq.s32.totalorder %s20, 0
      %p68 = por %p66, %p67
      %s69 = ssub.s32 %s21, %s40
      %s70 = ssub.s32 %s22, %s36
      %s71 = sor.u32 %s69, %s70
      %p72 = scmp.eq.s32.totalorder %s71, 0
      %s74 = sadd.s32 %s73, 1
      %s75 = scalar_select %p72, %s73, %s74
      %p78 = pneg %p72
      %p79 = scmp.eq.s32.totalorder %s14, 1
      %p80 = por %p78, %p79
      %p81 = scmp.ne.s32.totalorder %s73, %s76
      %p82 = scmp.eq.s32.totalorder %s14, 0
      %p83 = por %p81, %p82
      %p84 = scmp.ne.s32.totalorder %s73, %s76
      %p85 = scmp.eq.s32.totalorder %s19, 1
      %p86 = por %p84, %p85
      %p87 = scmp.ne.s32.totalorder %s76, %s77
      %p88 = scmp.eq.s32.totalorder %s19, 0
      %p89 = por %p87, %p88
      %p90 = scmp.ne.s32.totalorder %s76, %s77
      %p91 = scmp.eq.s32.totalorder %s20, 1
      %p92 = por %p90, %p91
      %p94 = scmp.ne.s32.totalorder %s77, %s93
      %p95 = scmp.eq.s32.totalorder %s20, 0
      %p96 = por %p94, %p95
      %s97 = ssub.s32 %s21, %s40
      %s98 = ssub.s32 %s23, %s32
      %s99 = sor.u32 %s97, %s98
      %p100 = scmp.eq.s32.totalorder %s99, 0
      %s102 = sadd.s32 %s101, 1
      %s103 = scalar_select %p100, %s101, %s102
      %p106 = pneg %p100
      %p107 = scmp.eq.s32.totalorder %s14, 1
      %p108 = por %p106, %p107
      %p109 = scmp.ne.s32.totalorder %s101, %s104
      %p110 = scmp.eq.s32.totalorder %s14, 0
      %p111 = por %p109, %p110
      %p112 = scmp.ne.s32.totalorder %s101, %s104
      %p113 = scmp.eq.s32.totalorder %s19, 1
      %p114 = por %p112, %p113
      %p115 = scmp.ne.s32.totalorder %s104, %s105
      %p116 = scmp.eq.s32.totalorder %s19, 0
      %p117 = por %p115, %p116
      %p118 = scmp.ne.s32.totalorder %s104, %s105
      %p119 = scmp.eq.s32.totalorder %s20, 1
      %p120 = por %p118, %p119
      %p122 = scmp.ne.s32.totalorder %s105, %s121
      %p123 = scmp.eq.s32.totalorder %s20, 0
      %p124 = por %p122, %p123
      %s125 = ssub.s32 %s21, %s40
      %s126 = ssub.s32 %s23, %s32
      %s127 = sor.u32 %s125, %s126
      %p128 = scmp.eq.s32.totalorder %s127, 0
      %s130 = sadd.s32 %s129, 1
      %s131 = scalar_select %p128, %s129, %s130
      %p134 = pneg %p128
      %p135 = scmp.eq.s32.totalorder %s14, 1
      %p136 = por %p134, %p135
      %p137 = scmp.ne.s32.totalorder %s129, %s132
      %p138 = scmp.eq.s32.totalorder %s14, 0
      %p139 = por %p137, %p138
      %p140 = scmp.ne.s32.totalorder %s129, %s132
      %p141 = scmp.eq.s32.totalorder %s19, 1
      %p142 = por %p140, %p141
      %p143 = scmp.ne.s32.totalorder %s132, %s133
      %p144 = scmp.eq.s32.totalorder %s19, 0
      %p145 = por %p143, %p144
      %p146 = scmp.ne.s32.totalorder %s132, %s133
      %p147 = scmp.eq.s32.totalorder %s20, 1
      %p148 = por %p146, %p147
      %p150 = scmp.ne.s32.totalorder %s133, %s149
      %p151 = scmp.eq.s32.totalorder %s20, 0
      %p152 = por %p150, %p151
      %s153 = ssub.s32 %s21, %s40
      %p154 = scmp.eq.s32.totalorder %s153, 0
      %s156 = sadd.s32 %s155, 1
      %s157 = scalar_select %p154, %s155, %s156
      %p160 = pneg %p154
      %p161 = scmp.eq.s32.totalorder %s14, 1
      %p162 = por %p160, %p161
      %p163 = scmp.ne.s32.totalorder %s155, %s158
      %p164 = scmp.eq.s32.totalorder %s14, 0
      %p165 = por %p163, %p164
      %p166 = scmp.ne.s32.totalorder %s155, %s158
      %p167 = scmp.eq.s32.totalorder %s19, 1
      %p168 = por %p166, %p167
      %p169 = scmp.ne.s32.totalorder %s158, %s159
      %p170 = scmp.eq.s32.totalorder %s19, 0
      %p171 = por %p169, %p170
      %p172 = scmp.ne.s32.totalorder %s158, %s159
      %p173 = scmp.eq.s32.totalorder %s20, 1
      %p174 = por %p172, %p173
      %p176 = scmp.ne.s32.totalorder %s159, %s175
      %p177 = scmp.eq.s32.totalorder %s20, 0
      %p178 = por %p176, %p177
      %s179 = ssub.s32 %s21, %s40
      %s180 = ssub.s32 %s22, %s36
      %s181 = sor.u32 %s179, %s180
      %p182 = scmp.eq.s32.totalorder %s181, 0
      %s184 = sadd.s32 %s183, 1
      %s185 = scalar_select %p182, %s183, %s184
      %p188 = pneg %p182
      %p189 = scmp.eq.s32.totalorder %s14, 1
      %p190 = por %p188, %p189
      %p191 = scmp.ne.s32.totalorder %s183, %s186
      %p192 = scmp.eq.s32.totalorder %s14, 0
      %p193 = por %p191, %p192
      %p194 = scmp.ne.s32.totalorder %s183, %s186
      %p195 = scmp.eq.s32.totalorder %s19, 1
      %p196 = por %p194, %p195
      %p197 = scmp.ne.s32.totalorder %s186, %s187
      %p198 = scmp.eq.s32.totalorder %s19, 0
      %p199 = por %p197, %p198
      %p200 = scmp.ne.s32.totalorder %s186, %s187
      %p201 = scmp.eq.s32.totalorder %s20, 1
      %p202 = por %p200, %p201
      %p204 = scmp.ne.s32.totalorder %s187, %s203
      %p205 = scmp.eq.s32.totalorder %s20, 0
      %p206 = por %p204, %p205
      %p207 = scmp.le.s32.totalorder 1, %s14
      %p208 = scmp.lt.s32.totalorder %s14, 3
      %p209 = pnand %p207, %p208
      %p210 = pneg %p209
      // Predicated region
      $region9: #{tpu_custom_call.1} parent=5 // pred_check
        _
      $region10: #{tpu_custom_call.1} parent=5 // pred_check_branch
        %212 = sbr.rel (%p209) target = $region12
      $region11: #{tpu_custom_call.1} parent=5 // pred_region
        %s213 = ssub.s32 %s14, 1
      $region12: #{tpu_custom_call.1} parent=5 // pred_fallthru
        _
      %p214 = scmp.lt.s32.totalorder %s14, 2
      // Predicated region
      $region13: #{tpu_custom_call.1} parent=5 // pred_check
        %p215 = pneg %p214
      $region14: #{tpu_custom_call.1} parent=5 // pred_check_branch
        %217 = sbr.rel (%p215) target = $region16
      $region15: #{tpu_custom_call.1} parent=5 // pred_region
        // Predicated region
        $region17: #{tpu_custom_call.1} parent=15 // pred_check
          %p218 = pneg %p55
        $region18: #{tpu_custom_call.1} parent=15 // pred_check_branch
          %220 = sbr.rel (%p218) target = $region20
        $region19: #{tpu_custom_call.1} parent=15 // pred_region
          %s221 = smul.u32 2, %s22
          %p222 = scmp.lt.s32.totalorder %s21, 1
          %s223 = scalar_select %p222, %s21, 1
          %p224 = scmp.lt.s32.totalorder %s221, 1
          %s225 = scalar_select %p224, %s221, 1
          %s226 = smul.addr %s223, 2
          %s227 = sadd.s32 %s225, %s226
          %s228 = scalar_lea.vmem %s0, %s227
          %s229 = smul.u32 2, %s22
        $region20: #{tpu_custom_call.1} parent=15 // pred_fallthru
          _
        // Predicated region
        $region21: #{tpu_custom_call.1} parent=15 // pred_check
          %p230 = pneg %p83
        $region22: #{tpu_custom_call.1} parent=15 // pred_check_branch
          %232 = sbr.rel (%p230) target = $region24
        $region23: #{tpu_custom_call.1} parent=15 // pred_region
          %s233 = smul.u32 2, %s22
          %p234 = scmp.lt.s32.totalorder %s21, 1
          %s235 = scalar_select %p234, %s21, 1
          %p236 = scmp.lt.s32.totalorder %s233, 1
          %s237 = scalar_select %p236, %s233, 1
          %s238 = smul.addr %s235, 2
          %s239 = sadd.s32 %s237, %s238
          %s240 = scalar_lea.vmem %s1, %s239
          %s241 = smul.u32 2, %s22
        $region24: #{tpu_custom_call.1} parent=15 // pred_fallthru
          _
        // Predicated region
        $region25: #{tpu_custom_call.1} parent=15 // pred_check
          %p242 = pneg %p111
        $region26: #{tpu_custom_call.1} parent=15 // pred_check_branch
          %244 = sbr.rel (%p242) target = $region28
        $region27: #{tpu_custom_call.1} parent=15 // pred_region
          %s245 = smul.u32 2, %s23
          %p246 = scmp.lt.s32.totalorder %s21, 1
          %s247 = scalar_select %p246, %s21, 1
          %p248 = scmp.lt.s32.totalorder %s245, 1
          %s249 = scalar_select %p248, %s245, 1
          %s250 = smul.addr %s247, 2
          %s251 = sadd.s32 %s249, %s250
          %s252 = scalar_lea.vmem %s2, %s251
          %s253 = smul.u32 2, %s23
        $region28: #{tpu_custom_call.1} parent=15 // pred_fallthru
          _
        // Predicated region
        $region29: #{tpu_custom_call.1} parent=15 // pred_check
          %p254 = pneg %p139
        $region30: #{tpu_custom_call.1} parent=15 // pred_check_branch
          %256 = sbr.rel (%p254) target = $region32
        $region31: #{tpu_custom_call.1} parent=15 // pred_region
          %s257 = smul.u32 32, %s23
          %p258 = scmp.lt.s32.totalorder %s21, 1
          %s259 = scalar_select %p258, %s21, 1
          %p260 = scmp.lt.s32.totalorder %s257, 31
          %s261 = scalar_select %p260, %s257, 31
          %s262 = smul.addr %s259, 32
          %s263 = sadd.s32 %s261, %s262
          %s264 = smul.addr %s263, 8
          %s265 = scalar_lea.vmem %s3, %s264
          %s266 = smul.u32 32, %s23
        $region32: #{tpu_custom_call.1} parent=15 // pred_fallthru
          _
        // Predicated region
        $region33: #{tpu_custom_call.1} parent=15 // pred_check
          %p267 = pneg %p165
        $region34: #{tpu_custom_call.1} parent=15 // pred_check_branch
          %269 = sbr.rel (%p267) target = $region36
        $region35: #{tpu_custom_call.1} parent=15 // pred_region
          %p270 = scmp.lt.s32.totalorder %s21, 1
          %s271 = scalar_select %p270, %s21, 1
          %s272 = scalar_lea.vmem %s4, %s271
        $region36: #{tpu_custom_call.1} parent=15 // pred_fallthru
          _
      $region16: #{tpu_custom_call.1} parent=5 // pred_fallthru
        _
      %p273 = scmp.le.s32.totalorder 1, %s14
      %p274 = scmp.lt.s32.totalorder %s14, 3
      %p275 = pnand %p273, %p274
      %p276 = pneg %p275
      // Predicated region
      $region37: #{tpu_custom_call.1} parent=5 // pred_check
        _
      $region38: #{tpu_custom_call.1} parent=5 // pred_check_branch
        %278 = sbr.rel (%p275) target = $region40
      $region39: #{tpu_custom_call.1} parent=5 // pred_region
        %s279 = ssub.s32 %s14, 1
        %s280 = smul.u32 2, %s25
        %p281 = scmp.lt.s32.totalorder %s24, 1
        %s282 = scalar_select %p281, %s24, 1
        %p283 = scmp.lt.s32.totalorder %s280, 1
        %s284 = scalar_select %p283, %s280, 1
        %s285 = smul.addr %s282, 2
        %s286 = sadd.s32 %s284, %s285
        %s287 = scalar_lea.vmem %s0, %s286
        %p288 = pneg %p61
        %p289 = pneg %p58
        %s290 = smul.u32 2, %s25
        %p291 = scmp.lt.s32.totalorder %s24, 1
        %s292 = scalar_select %p291, %s24, 1
        %p293 = scmp.lt.s32.totalorder %s290, 1
        %s294 = scalar_select %p293, %s290, 1
        %s295 = smul.addr %s292, 2
        %s296 = sadd.s32 %s294, %s295
        %s297 = scalar_lea.vmem %s1, %s296
        %p298 = pneg %p89
        %p299 = pneg %p86
        %s300 = smul.u32 2, %s26
        %p301 = scmp.lt.s32.totalorder %s24, 1
        %s302 = scalar_select %p301, %s24, 1
        %p303 = scmp.lt.s32.totalorder %s300, 1
        %s304 = scalar_select %p303, %s300, 1
        %s305 = smul.addr %s302, 2
        %s306 = sadd.s32 %s304, %s305
        %s307 = scalar_lea.vmem %s2, %s306
        %p308 = pneg %p117
        %p309 = pneg %p114
        %s310 = smul.u32 32, %s26
        %p311 = scmp.lt.s32.totalorder %s24, 1
        %s312 = scalar_select %p311, %s24, 1
        %p313 = scmp.lt.s32.totalorder %s310, 31
        %s314 = scalar_select %p313, %s310, 31
        %s315 = smul.addr %s312, 32
        %s316 = sadd.s32 %s314, %s315
        %s317 = smul.addr %s316, 8
        %s318 = scalar_lea.vmem %s3, %s317
        %p319 = pneg %p145
        %p320 = pneg %p142
        %p321 = scmp.lt.s32.totalorder %s24, 1
        %s322 = scalar_select %p321, %s24, 1
        %s323 = scalar_lea.vmem %s4, %s322
        %p324 = pneg %p171
        %p325 = pneg %p168
        %p326 = pneg %p199
        %p327 = pneg %p196
        %s328 = sand.u32 %s186, 1
        %s329 = scalar_lea.sflag [#allocation4], %s328
        %s330 = sand.u32 %s186, 1
        %s331 = smul.addr %s330, 8
        %s332 = scalar_lea.vmem [#allocation3], %s331
        %s333 = smul.u32 2, %s25
        %p334 = scmp.lt.s32.totalorder %s24, 1
        %s335 = scalar_select %p334, %s24, 1
        %p336 = scmp.lt.s32.totalorder %s333, 1
        %s337 = scalar_select %p336, %s333, 1
        %s338 = smul.addr %s335, 2
        %s339 = sadd.s32 %s337, %s338
        %s340 = scalar_lea.vmem %s0, %s339
        %s341 = smul.u32 2, %s25
        %s342 = smul.u32 2, %s25
        %p343 = scmp.lt.s32.totalorder %s24, 1
        %s344 = scalar_select %p343, %s24, 1
        %p345 = scmp.lt.s32.totalorder %s342, 1
        %s346 = scalar_select %p345, %s342, 1
        %s347 = smul.addr %s344, 2
        %s348 = sadd.s32 %s346, %s347
        %s349 = scalar_lea.vmem %s1, %s348
        %s350 = smul.u32 2, %s25
        %s351 = smul.u32 2, %s26
        %p352 = scmp.lt.s32.totalorder %s24, 1
        %s353 = scalar_select %p352, %s24, 1
        %p354 = scmp.lt.s32.totalorder %s351, 1
        %s355 = scalar_select %p354, %s351, 1
        %s356 = smul.addr %s353, 2
        %s357 = sadd.s32 %s355, %s356
        %s358 = scalar_lea.vmem %s2, %s357
        %s359 = smul.u32 2, %s26
        %s360 = smul.u32 32, %s26
        %p361 = scmp.lt.s32.totalorder %s24, 1
        %s362 = scalar_select %p361, %s24, 1
        %p363 = scmp.lt.s32.totalorder %s360, 31
        %s364 = scalar_select %p363, %s360, 31
        %s365 = smul.addr %s362, 32
        %s366 = sadd.s32 %s364, %s365
        %s367 = smul.addr %s366, 8
        %s368 = scalar_lea.vmem %s3, %s367
        %s369 = smul.u32 32, %s26
        %p370 = scmp.lt.s32.totalorder %s24, 1
        %s371 = scalar_select %p370, %s24, 1
        %s372 = scalar_lea.vmem %s4, %s371
        %p373 = scmp.eq.s32.totalorder %s26, 0
        // Predicated region
        $region41: #{tpu_custom_call.1} parent=39 // pred_check
          %p374 = pneg %p373
        $region42: #{tpu_custom_call.1} parent=39 // pred_check_branch
          %376 = sbr.rel (%p374) target = $region44
        $region43: #{tpu_custom_call.1} parent=39 // pred_region
          %377 = vst [vmem:[#allocation2] sm:$0xf] 0.0
        $region44: #{tpu_custom_call.1} parent=39 // pred_fallthru
          _
        %v378 = vld [vmem:[%s340] sm:$0x3]
        %v379 = vld [vmem:[%s368] sm:$0xff]
        %v380 = vld [vmem:[%s368 + $0x8] sm:$0xff]
        %v381 = vld [vmem:[%s368 + $0x10] sm:$0xff]
        %v382 = vld [vmem:[%s368 + $0x18] sm:$0xff]
        %v383 = vld [vmem:[%s368 + $0x20] sm:$0xff]
        %v384 = vld [vmem:[%s368 + $0x28] sm:$0xff]
        %v385 = vld [vmem:[%s368 + $0x30] sm:$0xff]
        %v386 = vld [vmem:[%s368 + $0x38] sm:$0xff]
        %v387 = vld [vmem:[%s368 + $0x40] sm:$0xff]
        %v388 = vld [vmem:[%s368 + $0x48] sm:$0xff]
        %v389 = vld [vmem:[%s368 + $0x50] sm:$0xff]
        %v390 = vld [vmem:[%s368 + $0x58] sm:$0xff]
        %v391 = vld [vmem:[%s368 + $0x60] sm:$0xff]
        %v392 = vld [vmem:[%s368 + $0x68] sm:$0xff]
        %v393 = vld [vmem:[%s368 + $0x70] sm:$0xff]
        %v394 = vld [vmem:[%s368 + $0x78] sm:$0xff]
        %v395 = vld [vmem:[%s368 + $0x80] sm:$0xff]
        %v396 = vld [vmem:[%s368 + $0x88] sm:$0xff]
        %v397 = vld [vmem:[%s368 + $0x90] sm:$0xff]
        %v398 = vld [vmem:[%s368 + $0x98] sm:$0xff]
        %v399 = vld [vmem:[%s368 + $0xa0] sm:$0xff]
        %v400 = vld [vmem:[%s368 + $0xa8] sm:$0xff]
        %v401 = vld [vmem:[%s368 + $0xb0] sm:$0xff]
        %v402 = vld [vmem:[%s368 + $0xb8] sm:$0xff]
        %v403 = vld [vmem:[%s368 + $0xc0] sm:$0xff]
        %v404 = vld [vmem:[%s368 + $0xc8] sm:$0xff]
        %v405 = vld [vmem:[%s368 + $0xd0] sm:$0xff]
        %v406 = vld [vmem:[%s368 + $0xd8] sm:$0xff]
        %v407 = vld [vmem:[%s368 + $0xe0] sm:$0xff]
        %v408 = vld [vmem:[%s368 + $0xe8] sm:$0xff]
        %v409 = vld [vmem:[%s368 + $0xf0] sm:$0xff]
        %v410 = vld [vmem:[%s368 + $0xf8] sm:$0xff]
        %v411 = vld [vmem:[%s358] sm:$0x3]
        %v412 = vlaneseq
        %v413 = vshrl.u32 %v412, 7
        %v415 = vperm.slane %v411, 0
        %v416 = vperm.slane %v411, 1
        %vm419 = vcmp.eq.s32.totalorder %v413, 0
        %vm420 = vcmp.eq.s32.totalorder %v413, 1
        %v421 = vsub.f32 1.0, %v415
        %v422 = vsub.f32 1.0, %v416
        %v423 = vsel %vm420, %v421, 0.0
        %v424 = vsel %vm420, %v422, 0.0
        %v425 = vsel %vm419, %v415, %v423
        %v426 = vsel %vm419, %v416, %v424
        %v427 = vpack.c.bf16 %v425, %v425
        %v428 = vpack.c.bf16 %v426, %v426
        %p429 = scmp.lt.s32.totalorder %s26, %s25
        // Predicated region
        $region45: #{tpu_custom_call.1} parent=39 // pred_check
          %p430 = pneg %p429
        $region46: #{tpu_custom_call.1} parent=39 // pred_check_branch
          %432 = sbr.rel (%p430) target = $region48
        $region47: #{tpu_custom_call.1} parent=39 // pred_region
          %434 = vset.pattern.permute.xlu0 0
          %435 = vperm.xlu0 %434, %v379
          %v436 = vpop.permute.xlu0 %435
          %439 = vset.pattern.permute.xlu0 0
          %440 = vperm.xlu0 %439, %v380
          %v441 = vpop.permute.xlu0 %440
          %444 = vset.pattern.permute.xlu0 0
          %445 = vperm.xlu0 %444, %v381
          %v446 = vpop.permute.xlu0 %445
          %449 = vset.pattern.permute.xlu0 0
          %450 = vperm.xlu0 %449, %v382
          %v451 = vpop.permute.xlu0 %450
          %454 = vset.pattern.permute.xlu0 0
          %455 = vperm.xlu0 %454, %v383
          %v456 = vpop.permute.xlu0 %455
          %459 = vset.pattern.permute.xlu0 0
          %460 = vperm.xlu0 %459, %v384
          %v461 = vpop.permute.xlu0 %460
          %464 = vset.pattern.permute.xlu0 0
          %465 = vperm.xlu0 %464, %v385
          %v466 = vpop.permute.xlu0 %465
          %469 = vset.pattern.permute.xlu0 0
          %470 = vperm.xlu0 %469, %v386
          %v471 = vpop.permute.xlu0 %470
          %474 = vset.pattern.permute.xlu0 0
          %475 = vperm.xlu0 %474, %v387
          %v476 = vpop.permute.xlu0 %475
          %479 = vset.pattern.permute.xlu0 0
          %480 = vperm.xlu0 %479, %v388
          %v481 = vpop.permute.xlu0 %480
          %484 = vset.pattern.permute.xlu0 0
          %485 = vperm.xlu0 %484, %v389
          %v486 = vpop.permute.xlu0 %485
          %489 = vset.pattern.permute.xlu0 0
          %490 = vperm.xlu0 %489, %v390
          %v491 = vpop.permute.xlu0 %490
          %494 = vset.pattern.permute.xlu0 0
          %495 = vperm.xlu0 %494, %v391
          %v496 = vpop.permute.xlu0 %495
          %499 = vset.pattern.permute.xlu0 0
          %500 = vperm.xlu0 %499, %v392
          %v501 = vpop.permute.xlu0 %500
          %504 = vset.pattern.permute.xlu0 0
          %505 = vperm.xlu0 %504, %v393
          %v506 = vpop.permute.xlu0 %505
          %509 = vset.pattern.permute.xlu0 0
          %510 = vperm.xlu0 %509, %v394
          %v511 = vpop.permute.xlu0 %510
          %514 = vset.pattern.permute.xlu0 0
          %515 = vperm.xlu0 %514, %v395
          %v516 = vpop.permute.xlu0 %515
          %519 = vset.pattern.permute.xlu0 0
          %520 = vperm.xlu0 %519, %v396
          %v521 = vpop.permute.xlu0 %520
          %524 = vset.pattern.permute.xlu0 0
          %525 = vperm.xlu0 %524, %v397
          %v526 = vpop.permute.xlu0 %525
          %529 = vset.pattern.permute.xlu0 0
          %530 = vperm.xlu0 %529, %v398
          %v531 = vpop.permute.xlu0 %530
          %534 = vset.pattern.permute.xlu0 0
          %535 = vperm.xlu0 %534, %v399
          %v536 = vpop.permute.xlu0 %535
          %539 = vset.pattern.permute.xlu0 0
          %540 = vperm.xlu0 %539, %v400
          %v541 = vpop.permute.xlu0 %540
          %544 = vset.pattern.permute.xlu0 0
          %545 = vperm.xlu0 %544, %v401
          %v546 = vpop.permute.xlu0 %545
          %549 = vset.pattern.permute.xlu0 0
          %550 = vperm.xlu0 %549, %v402
          %v551 = vpop.permute.xlu0 %550
          %554 = vset.pattern.permute.xlu0 0
          %555 = vperm.xlu0 %554, %v403
          %v556 = vpop.permute.xlu0 %555
          %559 = vset.pattern.permute.xlu0 0
          %560 = vperm.xlu0 %559, %v404
          %v561 = vpop.permute.xlu0 %560
          %564 = vset.pattern.permute.xlu0 0
          %565 = vperm.xlu0 %564, %v405
          %v566 = vpop.permute.xlu0 %565
          %569 = vset.pattern.permute.xlu0 0
          %570 = vperm.xlu0 %569, %v406
          %v571 = vpop.permute.xlu0 %570
          %574 = vset.pattern.permute.xlu0 0
          %575 = vperm.xlu0 %574, %v407
          %v576 = vpop.permute.xlu0 %575
          %579 = vset.pattern.permute.xlu0 0
          %580 = vperm.xlu0 %579, %v408
          %v581 = vpop.permute.xlu0 %580
          %584 = vset.pattern.permute.xlu0 0
          %585 = vperm.xlu0 %584, %v409
          %v586 = vpop.permute.xlu0 %585
          %589 = vset.pattern.permute.xlu0 0
          %590 = vperm.xlu0 %589, %v410
          %v591 = vpop.permute.xlu0 %590
          %v594 = vperm.slane %v378, 0
          %v595 = vperm.slane %v378, 1
          %vm598 = vcmp.ge.f32.partialorder %v436, %v594
          %vm599 = vcmp.ge.f32.partialorder %v436, %v595
          %vm600 = vcmp.ge.f32.partialorder %v441, %v594
          %vm601 = vcmp.ge.f32.partialorder %v441, %v595
          %vm602 = vcmp.ge.f32.partialorder %v446, %v594
          %vm603 = vcmp.ge.f32.partialorder %v446, %v595
          %vm604 = vcmp.ge.f32.partialorder %v451, %v594
          %vm605 = vcmp.ge.f32.partialorder %v451, %v595
          %vm606 = vcmp.ge.f32.partialorder %v456, %v594
          %vm607 = vcmp.ge.f32.partialorder %v456, %v595
          %vm608 = vcmp.ge.f32.partialorder %v461, %v594
          %vm609 = vcmp.ge.f32.partialorder %v461, %v595
          %vm610 = vcmp.ge.f32.partialorder %v466, %v594
          %vm611 = vcmp.ge.f32.partialorder %v466, %v595
          %vm612 = vcmp.ge.f32.partialorder %v471, %v594
          %vm613 = vcmp.ge.f32.partialorder %v471, %v595
          %vm614 = vcmp.ge.f32.partialorder %v476, %v594
          %vm615 = vcmp.ge.f32.partialorder %v476, %v595
          %vm616 = vcmp.ge.f32.partialorder %v481, %v594
          %vm617 = vcmp.ge.f32.partialorder %v481, %v595
          %vm618 = vcmp.ge.f32.partialorder %v486, %v594
          %vm619 = vcmp.ge.f32.partialorder %v486, %v595
          %vm620 = vcmp.ge.f32.partialorder %v491, %v594
          %vm621 = vcmp.ge.f32.partialorder %v491, %v595
          %vm622 = vcmp.ge.f32.partialorder %v496, %v594
          %vm623 = vcmp.ge.f32.partialorder %v496, %v595
          %vm624 = vcmp.ge.f32.partialorder %v501, %v594
          %vm625 = vcmp.ge.f32.partialorder %v501, %v595
          %vm626 = vcmp.ge.f32.partialorder %v506, %v594
          %vm627 = vcmp.ge.f32.partialorder %v506, %v595
          %vm628 = vcmp.ge.f32.partialorder %v511, %v594
          %vm629 = vcmp.ge.f32.partialorder %v511, %v595
          %vm630 = vcmp.ge.f32.partialorder %v516, %v594
          %vm631 = vcmp.ge.f32.partialorder %v516, %v595
          %vm632 = vcmp.ge.f32.partialorder %v521, %v594
          %vm633 = vcmp.ge.f32.partialorder %v521, %v595
          %vm634 = vcmp.ge.f32.partialorder %v526, %v594
          %vm635 = vcmp.ge.f32.partialorder %v526, %v595
          %vm636 = vcmp.ge.f32.partialorder %v531, %v594
          %vm637 = vcmp.ge.f32.partialorder %v531, %v595
          %vm638 = vcmp.ge.f32.partialorder %v536, %v594
          %vm639 = vcmp.ge.f32.partialorder %v536, %v595
          %vm640 = vcmp.ge.f32.partialorder %v541, %v594
          %vm641 = vcmp.ge.f32.partialorder %v541, %v595
          %vm642 = vcmp.ge.f32.partialorder %v546, %v594
          %vm643 = vcmp.ge.f32.partialorder %v546, %v595
          %vm644 = vcmp.ge.f32.partialorder %v551, %v594
          %vm645 = vcmp.ge.f32.partialorder %v551, %v595
          %vm646 = vcmp.ge.f32.partialorder %v556, %v594
          %vm647 = vcmp.ge.f32.partialorder %v556, %v595
          %vm648 = vcmp.ge.f32.partialorder %v561, %v594
          %vm649 = vcmp.ge.f32.partialorder %v561, %v595
          %vm650 = vcmp.ge.f32.partialorder %v566, %v594
          %vm651 = vcmp.ge.f32.partialorder %v566, %v595
          %vm652 = vcmp.ge.f32.partialorder %v571, %v594
          %vm653 = vcmp.ge.f32.partialorder %v571, %v595
          %vm654 = vcmp.ge.f32.partialorder %v576, %v594
          %vm655 = vcmp.ge.f32.partialorder %v576, %v595
          %vm656 = vcmp.ge.f32.partialorder %v581, %v594
          %vm657 = vcmp.ge.f32.partialorder %v581, %v595
          %vm658 = vcmp.ge.f32.partialorder %v586, %v594
          %vm659 = vcmp.ge.f32.partialorder %v586, %v595
          %vm660 = vcmp.ge.f32.partialorder %v591, %v594
          %vm661 = vcmp.ge.f32.partialorder %v591, %v595
          %v662 = vsel %vm598, 1, 0
          %v663 = vsel %vm599, 1, 0
          %v664 = vsel %vm600, 1, 0
          %v665 = vsel %vm601, 1, 0
          %v666 = vsel %vm602, 1, 0
          %v667 = vsel %vm603, 1, 0
          %v668 = vsel %vm604, 1, 0
          %v669 = vsel %vm605, 1, 0
          %v670 = vsel %vm606, 1, 0
          %v671 = vsel %vm607, 1, 0
          %v672 = vsel %vm608, 1, 0
          %v673 = vsel %vm609, 1, 0
          %v674 = vsel %vm610, 1, 0
          %v675 = vsel %vm611, 1, 0
          %v676 = vsel %vm612, 1, 0
          %v677 = vsel %vm613, 1, 0
          %v678 = vsel %vm614, 1, 0
          %v679 = vsel %vm615, 1, 0
          %v680 = vsel %vm616, 1, 0
          %v681 = vsel %vm617, 1, 0
          %v682 = vsel %vm618, 1, 0
          %v683 = vsel %vm619, 1, 0
          %v684 = vsel %vm620, 1, 0
          %v685 = vsel %vm621, 1, 0
          %v686 = vsel %vm622, 1, 0
          %v687 = vsel %vm623, 1, 0
          %v688 = vsel %vm624, 1, 0
          %v689 = vsel %vm625, 1, 0
          %v690 = vsel %vm626, 1, 0
          %v691 = vsel %vm627, 1, 0
          %v692 = vsel %vm628, 1, 0
          %v693 = vsel %vm629, 1, 0
          %v694 = vsel %vm630, 1, 0
          %v695 = vsel %vm631, 1, 0
          %v696 = vsel %vm632, 1, 0
          %v697 = vsel %vm633, 1, 0
          %v698 = vsel %vm634, 1, 0
          %v699 = vsel %vm635, 1, 0
          %v700 = vsel %vm636, 1, 0
          %v701 = vsel %vm637, 1, 0
          %v702 = vsel %vm638, 1, 0
          %v703 = vsel %vm639, 1, 0
          %v704 = vsel %vm640, 1, 0
          %v705 = vsel %vm641, 1, 0
          %v706 = vsel %vm642, 1, 0
          %v707 = vsel %vm643, 1, 0
          %v708 = vsel %vm644, 1, 0
          %v709 = vsel %vm645, 1, 0
          %v710 = vsel %vm646, 1, 0
          %v711 = vsel %vm647, 1, 0
          %v712 = vsel %vm648, 1, 0
          %v713 = vsel %vm649, 1, 0
          %v714 = vsel %vm650, 1, 0
          %v715 = vsel %vm651, 1, 0
          %v716 = vsel %vm652, 1, 0
          %v717 = vsel %vm653, 1, 0
          %v718 = vsel %vm654, 1, 0
          %v719 = vsel %vm655, 1, 0
          %v720 = vsel %vm656, 1, 0
          %v721 = vsel %vm657, 1, 0
          %v722 = vsel %vm658, 1, 0
          %v723 = vsel %vm659, 1, 0
          %v724 = vsel %vm660, 1, 0
          %v725 = vsel %vm661, 1, 0
          %v726 = vcvt.s32.f32 %v662
          %v727 = vcvt.s32.f32 %v663
          %v728 = vcvt.s32.f32 %v664
          %v729 = vcvt.s32.f32 %v665
          %v730 = vcvt.s32.f32 %v666
          %v731 = vcvt.s32.f32 %v667
          %v732 = vcvt.s32.f32 %v668
          %v733 = vcvt.s32.f32 %v669
          %v734 = vcvt.s32.f32 %v670
          %v735 = vcvt.s32.f32 %v671
          %v736 = vcvt.s32.f32 %v672
          %v737 = vcvt.s32.f32 %v673
          %v738 = vcvt.s32.f32 %v674
          %v739 = vcvt.s32.f32 %v675
          %v740 = vcvt.s32.f32 %v676
          %v741 = vcvt.s32.f32 %v677
          %v742 = vcvt.s32.f32 %v678
          %v743 = vcvt.s32.f32 %v679
          %v744 = vcvt.s32.f32 %v680
          %v745 = vcvt.s32.f32 %v681
          %v746 = vcvt.s32.f32 %v682
          %v747 = vcvt.s32.f32 %v683
          %v748 = vcvt.s32.f32 %v684
          %v749 = vcvt.s32.f32 %v685
          %v750 = vcvt.s32.f32 %v686
          %v751 = vcvt.s32.f32 %v687
          %v752 = vcvt.s32.f32 %v688
          %v753 = vcvt.s32.f32 %v689
          %v754 = vcvt.s32.f32 %v690
          %v755 = vcvt.s32.f32 %v691
          %v756 = vcvt.s32.f32 %v692
          %v757 = vcvt.s32.f32 %v693
          %v758 = vcvt.s32.f32 %v694
          %v759 = vcvt.s32.f32 %v695
          %v760 = vcvt.s32.f32 %v696
          %v761 = vcvt.s32.f32 %v697
          %v762 = vcvt.s32.f32 %v698
          %v763 = vcvt.s32.f32 %v699
          %v764 = vcvt.s32.f32 %v700
          %v765 = vcvt.s32.f32 %v701
          %v766 = vcvt.s32.f32 %v702
          %v767 = vcvt.s32.f32 %v703
          %v768 = vcvt.s32.f32 %v704
          %v769 = vcvt.s32.f32 %v705
          %v770 = vcvt.s32.f32 %v706
          %v771 = vcvt.s32.f32 %v707
          %v772 = vcvt.s32.f32 %v708
          %v773 = vcvt.s32.f32 %v709
          %v774 = vcvt.s32.f32 %v710
          %v775 = vcvt.s32.f32 %v711
          %v776 = vcvt.s32.f32 %v712
          %v777 = vcvt.s32.f32 %v713
          %v778 = vcvt.s32.f32 %v714
          %v779 = vcvt.s32.f32 %v715
          %v780 = vcvt.s32.f32 %v716
          %v781 = vcvt.s32.f32 %v717
          %v782 = vcvt.s32.f32 %v718
          %v783 = vcvt.s32.f32 %v719
          %v784 = vcvt.s32.f32 %v720
          %v785 = vcvt.s32.f32 %v721
          %v786 = vcvt.s32.f32 %v722
          %v787 = vcvt.s32.f32 %v723
          %v788 = vcvt.s32.f32 %v724
          %v789 = vcvt.s32.f32 %v725
          %v790 = vpack.c.bf16 %v728, %v726
          %v791 = vpack.c.bf16 %v729, %v727
          %v792 = vpack.c.bf16 %v732, %v730
          %v793 = vpack.c.bf16 %v733, %v731
          %v794 = vpack.c.bf16 %v736, %v734
          %v795 = vpack.c.bf16 %v737, %v735
          %v796 = vpack.c.bf16 %v740, %v738
          %v797 = vpack.c.bf16 %v741, %v739
          %v798 = vpack.c.bf16 %v744, %v742
          %v799 = vpack.c.bf16 %v745, %v743
          %v800 = vpack.c.bf16 %v748, %v746
          %v801 = vpack.c.bf16 %v749, %v747
          %v802 = vpack.c.bf16 %v752, %v750
          %v803 = vpack.c.bf16 %v753, %v751
          %v804 = vpack.c.bf16 %v756, %v754
          %v805 = vpack.c.bf16 %v757, %v755
          %v806 = vpack.c.bf16 %v760, %v758
          %v807 = vpack.c.bf16 %v761, %v759
          %v808 = vpack.c.bf16 %v764, %v762
          %v809 = vpack.c.bf16 %v765, %v763
          %v810 = vpack.c.bf16 %v768, %v766
          %v811 = vpack.c.bf16 %v769, %v767
          %v812 = vpack.c.bf16 %v772, %v770
          %v813 = vpack.c.bf16 %v773, %v771
          %v814 = vpack.c.bf16 %v776, %v774
          %v815 = vpack.c.bf16 %v777, %v775
          %v816 = vpack.c.bf16 %v780, %v778
          %v817 = vpack.c.bf16 %v781, %v779
          %v818 = vpack.c.bf16 %v784, %v782
          %v819 = vpack.c.bf16 %v785, %v783
          %v820 = vpack.c.bf16 %v788, %v786
          %v821 = vpack.c.bf16 %v789, %v787
          %822 = vmatpush.bf16.msra.mxu0 %v804
          %823 = vmatpush.bf16.msra.mxu0 %v802
          %824 = vmatpush.bf16.msra.mxu0 %v800
          %825 = vmatpush.bf16.msra.mxu0 %v798
          %826 = vmatpush.bf16.msra.mxu0 %v796
          %827 = vmatpush.bf16.msra.mxu0 %v794
          %828 = vmatpush.bf16.msra.mxu0 %v792
          %829 = vmatpush.bf16.msra.mxu0 %v790
          %830 = vmatmul.bf16.gmra.mxu0 %v427
          %v831 = vpop.f32.mrf.mxu0
          %v832 = vadd.f32 0.0, %v831
          %v833 = vpop.f32.mrf.mxu0
          %834 = vdwg.mxu0
          %835 = vmatpush.bf16.msra.mxu0 %v820
          %836 = vmatpush.bf16.msra.mxu0 %v818
          %837 = vmatpush.bf16.msra.mxu0 %v816
          %838 = vmatpush.bf16.msra.mxu0 %v814
          %839 = vmatpush.bf16.msra.mxu0 %v812
          %840 = vmatpush.bf16.msra.mxu0 %v810
          %841 = vmatpush.bf16.msra.mxu0 %v808
          %842 = vmatpush.bf16.msra.mxu0 %v806
          %843 = vmatmul.bf16.gmra.mxu0 %v428
          %v844 = vpop.f32.mrf.mxu0
          %v845 = vadd.f32 %v832, %v844
          %v846 = vpop.f32.mrf.mxu0
          %847 = vdwg.mxu0
          %848 = vmatpush.bf16.msra.mxu0 %v805
          %849 = vmatpush.bf16.msra.mxu0 %v803
          %850 = vmatpush.bf16.msra.mxu0 %v801
          %851 = vmatpush.bf16.msra.mxu0 %v799
          %852 = vmatpush.bf16.msra.mxu0 %v797
          %853 = vmatpush.bf16.msra.mxu0 %v795
          %854 = vmatpush.bf16.msra.mxu0 %v793
          %855 = vmatpush.bf16.msra.mxu0 %v791
          %856 = vmatmul.bf16.gmra.mxu0 %v427
          %v857 = vpop.f32.mrf.mxu0
          %v858 = vadd.f32 0.0, %v857
          %v859 = vpop.f32.mrf.mxu0
          %860 = vdwg.mxu0
          %861 = vmatpush.bf16.msra.mxu0 %v821
          %862 = vmatpush.bf16.msra.mxu0 %v819
          %863 = vmatpush.bf16.msra.mxu0 %v817
          %864 = vmatpush.bf16.msra.mxu0 %v815
          %865 = vmatpush.bf16.msra.mxu0 %v813
          %866 = vmatpush.bf16.msra.mxu0 %v811
          %867 = vmatpush.bf16.msra.mxu0 %v809
          %868 = vmatpush.bf16.msra.mxu0 %v807
          %869 = vmatmul.bf16.gmra.mxu0 %v428
          %v870 = vpop.f32.mrf.mxu0
          %v871 = vadd.f32 %v858, %v870
          %v872 = vpop.f32.mrf.mxu0
          %873 = vdwg.mxu0
          %v874 = vld [vmem:[#allocation2] sm:$0xf]
          %v877 = vrot.slane %v871, 6
          %vm878 = vcmask 1041408
          %v879 = vsel %vm878, %v845, %v877
          %v881 = vadd.f32 %v874, %v879
          %882 = vst [vmem:[#allocation2] sm:$0xf] %v881
        $region48: #{tpu_custom_call.1} parent=39 // pred_fallthru
          _
        %p883 = scmp.gt.s32.totalorder %s26, %s25
        // Predicated region
        $region49: #{tpu_custom_call.1} parent=39 // pred_check
          %p884 = pneg %p883
        $region50: #{tpu_custom_call.1} parent=39 // pred_check_branch
          %886 = sbr.rel (%p884) target = $region52
        $region51: #{tpu_custom_call.1} parent=39 // pred_region
          %888 = vset.pattern.permute.xlu0 0
          %889 = vperm.xlu0 %888, %v379
          %v890 = vpop.permute.xlu0 %889
          %893 = vset.pattern.permute.xlu0 0
          %894 = vperm.xlu0 %893, %v380
          %v895 = vpop.permute.xlu0 %894
          %898 = vset.pattern.permute.xlu0 0
          %899 = vperm.xlu0 %898, %v381
          %v900 = vpop.permute.xlu0 %899
          %903 = vset.pattern.permute.xlu0 0
          %904 = vperm.xlu0 %903, %v382
          %v905 = vpop.permute.xlu0 %904
          %908 = vset.pattern.permute.xlu0 0
          %909 = vperm.xlu0 %908, %v383
          %v910 = vpop.permute.xlu0 %909
          %913 = vset.pattern.permute.xlu0 0
          %914 = vperm.xlu0 %913, %v384
          %v915 = vpop.permute.xlu0 %914
          %918 = vset.pattern.permute.xlu0 0
          %919 = vperm.xlu0 %918, %v385
          %v920 = vpop.permute.xlu0 %919
          %923 = vset.pattern.permute.xlu0 0
          %924 = vperm.xlu0 %923, %v386
          %v925 = vpop.permute.xlu0 %924
          %928 = vset.pattern.permute.xlu0 0
          %929 = vperm.xlu0 %928, %v387
          %v930 = vpop.permute.xlu0 %929
          %933 = vset.pattern.permute.xlu0 0
          %934 = vperm.xlu0 %933, %v388
          %v935 = vpop.permute.xlu0 %934
          %938 = vset.pattern.permute.xlu0 0
          %939 = vperm.xlu0 %938, %v389
          %v940 = vpop.permute.xlu0 %939
          %943 = vset.pattern.permute.xlu0 0
          %944 = vperm.xlu0 %943, %v390
          %v945 = vpop.permute.xlu0 %944
          %948 = vset.pattern.permute.xlu0 0
          %949 = vperm.xlu0 %948, %v391
          %v950 = vpop.permute.xlu0 %949
          %953 = vset.pattern.permute.xlu0 0
          %954 = vperm.xlu0 %953, %v392
          %v955 = vpop.permute.xlu0 %954
          %958 = vset.pattern.permute.xlu0 0
          %959 = vperm.xlu0 %958, %v393
          %v960 = vpop.permute.xlu0 %959
          %963 = vset.pattern.permute.xlu0 0
          %964 = vperm.xlu0 %963, %v394
          %v965 = vpop.permute.xlu0 %964
          %968 = vset.pattern.permute.xlu0 0
          %969 = vperm.xlu0 %968, %v395
          %v970 = vpop.permute.xlu0 %969
          %973 = vset.pattern.permute.xlu0 0
          %974 = vperm.xlu0 %973, %v396
          %v975 = vpop.permute.xlu0 %974
          %978 = vset.pattern.permute.xlu0 0
          %979 = vperm.xlu0 %978, %v397
          %v980 = vpop.permute.xlu0 %979
          %983 = vset.pattern.permute.xlu0 0
          %984 = vperm.xlu0 %983, %v398
          %v985 = vpop.permute.xlu0 %984
          %988 = vset.pattern.permute.xlu0 0
          %989 = vperm.xlu0 %988, %v399
          %v990 = vpop.permute.xlu0 %989
          %993 = vset.pattern.permute.xlu0 0
          %994 = vperm.xlu0 %993, %v400
          %v995 = vpop.permute.xlu0 %994
          %998 = vset.pattern.permute.xlu0 0
          %999 = vperm.xlu0 %998, %v401
          %v1000 = vpop.permute.xlu0 %999
          %1003 = vset.pattern.permute.xlu0 0
          %1004 = vperm.xlu0 %1003, %v402
          %v1005 = vpop.permute.xlu0 %1004
          %1008 = vset.pattern.permute.xlu0 0
          %1009 = vperm.xlu0 %1008, %v403
          %v1010 = vpop.permute.xlu0 %1009
          %1013 = vset.pattern.permute.xlu0 0
          %1014 = vperm.xlu0 %1013, %v404
          %v1015 = vpop.permute.xlu0 %1014
          %1018 = vset.pattern.permute.xlu0 0
          %1019 = vperm.xlu0 %1018, %v405
          %v1020 = vpop.permute.xlu0 %1019
          %1023 = vset.pattern.permute.xlu0 0
          %1024 = vperm.xlu0 %1023, %v406
          %v1025 = vpop.permute.xlu0 %1024
          %1028 = vset.pattern.permute.xlu0 0
          %1029 = vperm.xlu0 %1028, %v407
          %v1030 = vpop.permute.xlu0 %1029
          %1033 = vset.pattern.permute.xlu0 0
          %1034 = vperm.xlu0 %1033, %v408
          %v1035 = vpop.permute.xlu0 %1034
          %1038 = vset.pattern.permute.xlu0 0
          %1039 = vperm.xlu0 %1038, %v409
          %v1040 = vpop.permute.xlu0 %1039
          %1043 = vset.pattern.permute.xlu0 0
          %1044 = vperm.xlu0 %1043, %v410
          %v1045 = vpop.permute.xlu0 %1044
          %v1048 = vperm.slane %v378, 0
          %v1049 = vperm.slane %v378, 1
          %vm1052 = vcmp.gt.f32.partialorder %v890, %v1048
          %vm1053 = vcmp.gt.f32.partialorder %v890, %v1049
          %vm1054 = vcmp.gt.f32.partialorder %v895, %v1048
          %vm1055 = vcmp.gt.f32.partialorder %v895, %v1049
          %vm1056 = vcmp.gt.f32.partialorder %v900, %v1048
          %vm1057 = vcmp.gt.f32.partialorder %v900, %v1049
          %vm1058 = vcmp.gt.f32.partialorder %v905, %v1048
          %vm1059 = vcmp.gt.f32.partialorder %v905, %v1049
          %vm1060 = vcmp.gt.f32.partialorder %v910, %v1048
          %vm1061 = vcmp.gt.f32.partialorder %v910, %v1049
          %vm1062 = vcmp.gt.f32.partialorder %v915, %v1048
          %vm1063 = vcmp.gt.f32.partialorder %v915, %v1049
          %vm1064 = vcmp.gt.f32.partialorder %v920, %v1048
          %vm1065 = vcmp.gt.f32.partialorder %v920, %v1049
          %vm1066 = vcmp.gt.f32.partialorder %v925, %v1048
          %vm1067 = vcmp.gt.f32.partialorder %v925, %v1049
          %vm1068 = vcmp.gt.f32.partialorder %v930, %v1048
          %vm1069 = vcmp.gt.f32.partialorder %v930, %v1049
          %vm1070 = vcmp.gt.f32.partialorder %v935, %v1048
          %vm1071 = vcmp.gt.f32.partialorder %v935, %v1049
          %vm1072 = vcmp.gt.f32.partialorder %v940, %v1048
          %vm1073 = vcmp.gt.f32.partialorder %v940, %v1049
          %vm1074 = vcmp.gt.f32.partialorder %v945, %v1048
          %vm1075 = vcmp.gt.f32.partialorder %v945, %v1049
          %vm1076 = vcmp.gt.f32.partialorder %v950, %v1048
          %vm1077 = vcmp.gt.f32.partialorder %v950, %v1049
          %vm1078 = vcmp.gt.f32.partialorder %v955, %v1048
          %vm1079 = vcmp.gt.f32.partialorder %v955, %v1049
          %vm1080 = vcmp.gt.f32.partialorder %v960, %v1048
          %vm1081 = vcmp.gt.f32.partialorder %v960, %v1049
          %vm1082 = vcmp.gt.f32.partialorder %v965, %v1048
          %vm1083 = vcmp.gt.f32.partialorder %v965, %v1049
          %vm1084 = vcmp.gt.f32.partialorder %v970, %v1048
          %vm1085 = vcmp.gt.f32.partialorder %v970, %v1049
          %vm1086 = vcmp.gt.f32.partialorder %v975, %v1048
          %vm1087 = vcmp.gt.f32.partialorder %v975, %v1049
          %vm1088 = vcmp.gt.f32.partialorder %v980, %v1048
          %vm1089 = vcmp.gt.f32.partialorder %v980, %v1049
          %vm1090 = vcmp.gt.f32.partialorder %v985, %v1048
          %vm1091 = vcmp.gt.f32.partialorder %v985, %v1049
          %vm1092 = vcmp.gt.f32.partialorder %v990, %v1048
          %vm1093 = vcmp.gt.f32.partialorder %v990, %v1049
          %vm1094 = vcmp.gt.f32.partialorder %v995, %v1048
          %vm1095 = vcmp.gt.f32.partialorder %v995, %v1049
          %vm1096 = vcmp.gt.f32.partialorder %v1000, %v1048
          %vm1097 = vcmp.gt.f32.partialorder %v1000, %v1049
          %vm1098 = vcmp.gt.f32.partialorder %v1005, %v1048
          %vm1099 = vcmp.gt.f32.partialorder %v1005, %v1049
          %vm1100 = vcmp.gt.f32.partialorder %v1010, %v1048
          %vm1101 = vcmp.gt.f32.partialorder %v1010, %v1049
          %vm1102 = vcmp.gt.f32.partialorder %v1015, %v1048
          %vm1103 = vcmp.gt.f32.partialorder %v1015, %v1049
          %vm1104 = vcmp.gt.f32.partialorder %v1020, %v1048
          %vm1105 = vcmp.gt.f32.partialorder %v1020, %v1049
          %vm1106 = vcmp.gt.f32.partialorder %v1025, %v1048
          %vm1107 = vcmp.gt.f32.partialorder %v1025, %v1049
          %vm1108 = vcmp.gt.f32.partialorder %v1030, %v1048
          %vm1109 = vcmp.gt.f32.partialorder %v1030, %v1049
          %vm1110 = vcmp.gt.f32.partialorder %v1035, %v1048
          %vm1111 = vcmp.gt.f32.partialorder %v1035, %v1049
          %vm1112 = vcmp.gt.f32.partialorder %v1040, %v1048
          %vm1113 = vcmp.gt.f32.partialorder %v1040, %v1049
          %vm1114 = vcmp.gt.f32.partialorder %v1045, %v1048
          %vm1115 = vcmp.gt.f32.partialorder %v1045, %v1049
          %v1116 = vsel %vm1052, 1, 0
          %v1117 = vsel %vm1053, 1, 0
          %v1118 = vsel %vm1054, 1, 0
          %v1119 = vsel %vm1055, 1, 0
          %v1120 = vsel %vm1056, 1, 0
          %v1121 = vsel %vm1057, 1, 0
          %v1122 = vsel %vm1058, 1, 0
          %v1123 = vsel %vm1059, 1, 0
          %v1124 = vsel %vm1060, 1, 0
          %v1125 = vsel %vm1061, 1, 0
          %v1126 = vsel %vm1062, 1, 0
          %v1127 = vsel %vm1063, 1, 0
          %v1128 = vsel %vm1064, 1, 0
          %v1129 = vsel %vm1065, 1, 0
          %v1130 = vsel %vm1066, 1, 0
          %v1131 = vsel %vm1067, 1, 0
          %v1132 = vsel %vm1068, 1, 0
          %v1133 = vsel %vm1069, 1, 0
          %v1134 = vsel %vm1070, 1, 0
          %v1135 = vsel %vm1071, 1, 0
          %v1136 = vsel %vm1072, 1, 0
          %v1137 = vsel %vm1073, 1, 0
          %v1138 = vsel %vm1074, 1, 0
          %v1139 = vsel %vm1075, 1, 0
          %v1140 = vsel %vm1076, 1, 0
          %v1141 = vsel %vm1077, 1, 0
          %v1142 = vsel %vm1078, 1, 0
          %v1143 = vsel %vm1079, 1, 0
          %v1144 = vsel %vm1080, 1, 0
          %v1145 = vsel %vm1081, 1, 0
          %v1146 = vsel %vm1082, 1, 0
          %v1147 = vsel %vm1083, 1, 0
          %v1148 = vsel %vm1084, 1, 0
          %v1149 = vsel %vm1085, 1, 0
          %v1150 = vsel %vm1086, 1, 0
          %v1151 = vsel %vm1087, 1, 0
          %v1152 = vsel %vm1088, 1, 0
          %v1153 = vsel %vm1089, 1, 0
          %v1154 = vsel %vm1090, 1, 0
          %v1155 = vsel %vm1091, 1, 0
          %v1156 = vsel %vm1092, 1, 0
          %v1157 = vsel %vm1093, 1, 0
          %v1158 = vsel %vm1094, 1, 0
          %v1159 = vsel %vm1095, 1, 0
          %v1160 = vsel %vm1096, 1, 0
          %v1161 = vsel %vm1097, 1, 0
          %v1162 = vsel %vm1098, 1, 0
          %v1163 = vsel %vm1099, 1, 0
          %v1164 = vsel %vm1100, 1, 0
          %v1165 = vsel %vm1101, 1, 0
          %v1166 = vsel %vm1102, 1, 0
          %v1167 = vsel %vm1103, 1, 0
          %v1168 = vsel %vm1104, 1, 0
          %v1169 = vsel %vm1105, 1, 0
          %v1170 = vsel %vm1106, 1, 0
          %v1171 = vsel %vm1107, 1, 0
          %v1172 = vsel %vm1108, 1, 0
          %v1173 = vsel %vm1109, 1, 0
          %v1174 = vsel %vm1110, 1, 0
          %v1175 = vsel %vm1111, 1, 0
          %v1176 = vsel %vm1112, 1, 0
          %v1177 = vsel %vm1113, 1, 0
          %v1178 = vsel %vm1114, 1, 0
          %v1179 = vsel %vm1115, 1, 0
          %v1180 = vcvt.s32.f32 %v1116
          %v1181 = vcvt.s32.f32 %v1117
          %v1182 = vcvt.s32.f32 %v1118
          %v1183 = vcvt.s32.f32 %v1119
          %v1184 = vcvt.s32.f32 %v1120
          %v1185 = vcvt.s32.f32 %v1121
          %v1186 = vcvt.s32.f32 %v1122
          %v1187 = vcvt.s32.f32 %v1123
          %v1188 = vcvt.s32.f32 %v1124
          %v1189 = vcvt.s32.f32 %v1125
          %v1190 = vcvt.s32.f32 %v1126
          %v1191 = vcvt.s32.f32 %v1127
          %v1192 = vcvt.s32.f32 %v1128
          %v1193 = vcvt.s32.f32 %v1129
          %v1194 = vcvt.s32.f32 %v1130
          %v1195 = vcvt.s32.f32 %v1131
          %v1196 = vcvt.s32.f32 %v1132
          %v1197 = vcvt.s32.f32 %v1133
          %v1198 = vcvt.s32.f32 %v1134
          %v1199 = vcvt.s32.f32 %v1135
          %v1200 = vcvt.s32.f32 %v1136
          %v1201 = vcvt.s32.f32 %v1137
          %v1202 = vcvt.s32.f32 %v1138
          %v1203 = vcvt.s32.f32 %v1139
          %v1204 = vcvt.s32.f32 %v1140
          %v1205 = vcvt.s32.f32 %v1141
          %v1206 = vcvt.s32.f32 %v1142
          %v1207 = vcvt.s32.f32 %v1143
          %v1208 = vcvt.s32.f32 %v1144
          %v1209 = vcvt.s32.f32 %v1145
          %v1210 = vcvt.s32.f32 %v1146
          %v1211 = vcvt.s32.f32 %v1147
          %v1212 = vcvt.s32.f32 %v1148
          %v1213 = vcvt.s32.f32 %v1149
          %v1214 = vcvt.s32.f32 %v1150
          %v1215 = vcvt.s32.f32 %v1151
          %v1216 = vcvt.s32.f32 %v1152
          %v1217 = vcvt.s32.f32 %v1153
          %v1218 = vcvt.s32.f32 %v1154
          %v1219 = vcvt.s32.f32 %v1155
          %v1220 = vcvt.s32.f32 %v1156
          %v1221 = vcvt.s32.f32 %v1157
          %v1222 = vcvt.s32.f32 %v1158
          %v1223 = vcvt.s32.f32 %v1159
          %v1224 = vcvt.s32.f32 %v1160
          %v1225 = vcvt.s32.f32 %v1161
          %v1226 = vcvt.s32.f32 %v1162
          %v1227 = vcvt.s32.f32 %v1163
          %v1228 = vcvt.s32.f32 %v1164
          %v1229 = vcvt.s32.f32 %v1165
          %v1230 = vcvt.s32.f32 %v1166
          %v1231 = vcvt.s32.f32 %v1167
          %v1232 = vcvt.s32.f32 %v1168
          %v1233 = vcvt.s32.f32 %v1169
          %v1234 = vcvt.s32.f32 %v1170
          %v1235 = vcvt.s32.f32 %v1171
          %v1236 = vcvt.s32.f32 %v1172
          %v1237 = vcvt.s32.f32 %v1173
          %v1238 = vcvt.s32.f32 %v1174
          %v1239 = vcvt.s32.f32 %v1175
          %v1240 = vcvt.s32.f32 %v1176
          %v1241 = vcvt.s32.f32 %v1177
          %v1242 = vcvt.s32.f32 %v1178
          %v1243 = vcvt.s32.f32 %v1179
          %v1244 = vpack.c.bf16 %v1182, %v1180
          %v1245 = vpack.c.bf16 %v1183, %v1181
          %v1246 = vpack.c.bf16 %v1186, %v1184
          %v1247 = vpack.c.bf16 %v1187, %v1185
          %v1248 = vpack.c.bf16 %v1190, %v1188
          %v1249 = vpack.c.bf16 %v1191, %v1189
          %v1250 = vpack.c.bf16 %v1194, %v1192
          %v1251 = vpack.c.bf16 %v1195, %v1193
          %v1252 = vpack.c.bf16 %v1198, %v1196
          %v1253 = vpack.c.bf16 %v1199, %v1197
          %v1254 = vpack.c.bf16 %v1202, %v1200
          %v1255 = vpack.c.bf16 %v1203, %v1201
          %v1256 = vpack.c.bf16 %v1206, %v1204
          %v1257 = vpack.c.bf16 %v1207, %v1205
          %v1258 = vpack.c.bf16 %v1210, %v1208
          %v1259 = vpack.c.bf16 %v1211, %v1209
          %v1260 = vpack.c.bf16 %v1214, %v1212
          %v1261 = vpack.c.bf16 %v1215, %v1213
          %v1262 = vpack.c.bf16 %v1218, %v1216
          %v1263 = vpack.c.bf16 %v1219, %v1217
          %v1264 = vpack.c.bf16 %v1222, %v1220
          %v1265 = vpack.c.bf16 %v1223, %v1221
          %v1266 = vpack.c.bf16 %v1226, %v1224
          %v1267 = vpack.c.bf16 %v1227, %v1225
          %v1268 = vpack.c.bf16 %v1230, %v1228
          %v1269 = vpack.c.bf16 %v1231, %v1229
          %v1270 = vpack.c.bf16 %v1234, %v1232
          %v1271 = vpack.c.bf16 %v1235, %v1233
          %v1272 = vpack.c.bf16 %v1238, %v1236
          %v1273 = vpack.c.bf16 %v1239, %v1237
          %v1274 = vpack.c.bf16 %v1242, %v1240
          %v1275 = vpack.c.bf16 %v1243, %v1241
          %1276 = vmatpush.bf16.msra.mxu0 %v1258
          %1277 = vmatpush.bf16.msra.mxu0 %v1256
          %1278 = vmatpush.bf16.msra.mxu0 %v1254
          %1279 = vmatpush.bf16.msra.mxu0 %v1252
          %1280 = vmatpush.bf16.msra.mxu0 %v1250
          %1281 = vmatpush.bf16.msra.mxu0 %v1248
          %1282 = vmatpush.bf16.msra.mxu0 %v1246
          %1283 = vmatpush.bf16.msra.mxu0 %v1244
          %1284 = vmatmul.bf16.gmra.mxu0 %v427
          %v1285 = vpop.f32.mrf.mxu0
          %v1286 = vadd.f32 0.0, %v1285
          %v1287 = vpop.f32.mrf.mxu0
          %1288 = vdwg.mxu0
          %1289 = vmatpush.bf16.msra.mxu0 %v1274
          %1290 = vmatpush.bf16.msra.mxu0 %v1272
          %1291 = vmatpush.bf16.msra.mxu0 %v1270
          %1292 = vmatpush.bf16.msra.mxu0 %v1268
          %1293 = vmatpush.bf16.msra.mxu0 %v1266
          %1294 = vmatpush.bf16.msra.mxu0 %v1264
          %1295 = vmatpush.bf16.msra.mxu0 %v1262
          %1296 = vmatpush.bf16.msra.mxu0 %v1260
          %1297 = vmatmul.bf16.gmra.mxu0 %v428
          %v1298 = vpop.f32.mrf.mxu0
          %v1299 = vadd.f32 %v1286, %v1298
          %v1300 = vpop.f32.mrf.mxu0
          %1301 = vdwg.mxu0
          %1302 = vmatpush.bf16.msra.mxu0 %v1259
          %1303 = vmatpush.bf16.msra.mxu0 %v1257
          %1304 = vmatpush.bf16.msra.mxu0 %v1255
          %1305 = vmatpush.bf16.msra.mxu0 %v1253
          %1306 = vmatpush.bf16.msra.mxu0 %v1251
          %1307 = vmatpush.bf16.msra.mxu0 %v1249
          %1308 = vmatpush.bf16.msra.mxu0 %v1247
          %1309 = vmatpush.bf16.msra.mxu0 %v1245
          %1310 = vmatmul.bf16.gmra.mxu0 %v427
          %v1311 = vpop.f32.mrf.mxu0
          %v1312 = vadd.f32 0.0, %v1311
          %v1313 = vpop.f32.mrf.mxu0
          %1314 = vdwg.mxu0
          %1315 = vmatpush.bf16.msra.mxu0 %v1275
          %1316 = vmatpush.bf16.msra.mxu0 %v1273
          %1317 = vmatpush.bf16.msra.mxu0 %v1271
          %1318 = vmatpush.bf16.msra.mxu0 %v1269
          %1319 = vmatpush.bf16.msra.mxu0 %v1267
          %1320 = vmatpush.bf16.msra.mxu0 %v1265
          %1321 = vmatpush.bf16.msra.mxu0 %v1263
          %1322 = vmatpush.bf16.msra.mxu0 %v1261
          %1323 = vmatmul.bf16.gmra.mxu0 %v428
          %v1324 = vpop.f32.mrf.mxu0
          %v1325 = vadd.f32 %v1312, %v1324
          %v1326 = vpop.f32.mrf.mxu0
          %1327 = vdwg.mxu0
          %v1328 = vld [vmem:[#allocation2] sm:$0xf]
          %v1331 = vrot.slane %v1325, 6
          %vm1332 = vcmask 1041408
          %v1333 = vsel %vm1332, %v1299, %v1331
          %v1335 = vadd.f32 %v1328, %v1333
          %1336 = vst [vmem:[#allocation2] sm:$0xf] %v1335
        $region52: #{tpu_custom_call.1} parent=39 // pred_fallthru
          _
        %p1337 = scmp.eq.s32.totalorder %s26, %s25
        // Predicated region
        $region53: #{tpu_custom_call.1} parent=39 // pred_check
          %p1338 = pneg %p1337
        $region54: #{tpu_custom_call.1} parent=39 // pred_check_branch
          %1340 = sbr.rel (%p1338) target = $region56
        $region55: #{tpu_custom_call.1} parent=39 // pred_region
          %v1341 = vadd.s32 %v413, 8
          %v1342 = vadd.s32 %v413, 16
          %v1343 = vadd.s32 %v413, 24
          %v1344 = vadd.s32 %v413, 32
          %v1345 = vadd.s32 %v413, 40
          %v1346 = vadd.s32 %v413, 48
          %v1347 = vadd.s32 %v413, 56
          %v1348 = vadd.s32 %v413, 64
          %v1349 = vadd.s32 %v413, 72
          %v1350 = vadd.s32 %v413, 80
          %v1351 = vadd.s32 %v413, 88
          %v1352 = vadd.s32 %v413, 96
          %v1353 = vadd.s32 %v413, 104
          %v1354 = vadd.s32 %v413, 112
          %v1355 = vadd.s32 %v413, 120
          %v1356 = vadd.s32 %v413, 128
          %v1357 = vadd.s32 %v413, 136
          %v1358 = vadd.s32 %v413, 144
          %v1359 = vadd.s32 %v413, 152
          %v1360 = vadd.s32 %v413, 160
          %v1361 = vadd.s32 %v413, 168
          %v1362 = vadd.s32 %v413, 176
          %v1363 = vadd.s32 %v413, 184
          %v1364 = vadd.s32 %v413, 192
          %v1365 = vadd.s32 %v413, 200
          %v1366 = vadd.s32 %v413, 208
          %v1367 = vadd.s32 %v413, 216
          %v1368 = vadd.s32 %v413, 224
          %v1369 = vadd.s32 %v413, 232
          %v1370 = vadd.s32 %v413, 240
          %v1371 = vadd.s32 %v413, 248
          %v1372 = vlaneseq
          %v1373 = vand.u32 %v1372, 127
          %v1374 = vadd.s32 %v1373, 128
          %1376 = vset.pattern.permute.xlu0 0
          %1377 = vperm.xlu0 %1376, %v379
          %v1378 = vpop.permute.xlu0 %1377
          %1381 = vset.pattern.permute.xlu0 0
          %1382 = vperm.xlu0 %1381, %v380
          %v1383 = vpop.permute.xlu0 %1382
          %1386 = vset.pattern.permute.xlu0 0
          %1387 = vperm.xlu0 %1386, %v381
          %v1388 = vpop.permute.xlu0 %1387
          %1391 = vset.pattern.permute.xlu0 0
          %1392 = vperm.xlu0 %1391, %v382
          %v1393 = vpop.permute.xlu0 %1392
          %1396 = vset.pattern.permute.xlu0 0
          %1397 = vperm.xlu0 %1396, %v383
          %v1398 = vpop.permute.xlu0 %1397
          %1401 = vset.pattern.permute.xlu0 0
          %1402 = vperm.xlu0 %1401, %v384
          %v1403 = vpop.permute.xlu0 %1402
          %1406 = vset.pattern.permute.xlu0 0
          %1407 = vperm.xlu0 %1406, %v385
          %v1408 = vpop.permute.xlu0 %1407
          %1411 = vset.pattern.permute.xlu0 0
          %1412 = vperm.xlu0 %1411, %v386
          %v1413 = vpop.permute.xlu0 %1412
          %1416 = vset.pattern.permute.xlu0 0
          %1417 = vperm.xlu0 %1416, %v387
          %v1418 = vpop.permute.xlu0 %1417
          %1421 = vset.pattern.permute.xlu0 0
          %1422 = vperm.xlu0 %1421, %v388
          %v1423 = vpop.permute.xlu0 %1422
          %1426 = vset.pattern.permute.xlu0 0
          %1427 = vperm.xlu0 %1426, %v389
          %v1428 = vpop.permute.xlu0 %1427
          %1431 = vset.pattern.permute.xlu0 0
          %1432 = vperm.xlu0 %1431, %v390
          %v1433 = vpop.permute.xlu0 %1432
          %1436 = vset.pattern.permute.xlu0 0
          %1437 = vperm.xlu0 %1436, %v391
          %v1438 = vpop.permute.xlu0 %1437
          %1441 = vset.pattern.permute.xlu0 0
          %1442 = vperm.xlu0 %1441, %v392
          %v1443 = vpop.permute.xlu0 %1442
          %1446 = vset.pattern.permute.xlu0 0
          %1447 = vperm.xlu0 %1446, %v393
          %v1448 = vpop.permute.xlu0 %1447
          %1451 = vset.pattern.permute.xlu0 0
          %1452 = vperm.xlu0 %1451, %v394
          %v1453 = vpop.permute.xlu0 %1452
          %1456 = vset.pattern.permute.xlu0 0
          %1457 = vperm.xlu0 %1456, %v395
          %v1458 = vpop.permute.xlu0 %1457
          %1461 = vset.pattern.permute.xlu0 0
          %1462 = vperm.xlu0 %1461, %v396
          %v1463 = vpop.permute.xlu0 %1462
          %1466 = vset.pattern.permute.xlu0 0
          %1467 = vperm.xlu0 %1466, %v397
          %v1468 = vpop.permute.xlu0 %1467
          %1471 = vset.pattern.permute.xlu0 0
          %1472 = vperm.xlu0 %1471, %v398
          %v1473 = vpop.permute.xlu0 %1472
          %1476 = vset.pattern.permute.xlu0 0
          %1477 = vperm.xlu0 %1476, %v399
          %v1478 = vpop.permute.xlu0 %1477
          %1481 = vset.pattern.permute.xlu0 0
          %1482 = vperm.xlu0 %1481, %v400
          %v1483 = vpop.permute.xlu0 %1482
          %1486 = vset.pattern.permute.xlu0 0
          %1487 = vperm.xlu0 %1486, %v401
          %v1488 = vpop.permute.xlu0 %1487
          %1491 = vset.pattern.permute.xlu0 0
          %1492 = vperm.xlu0 %1491, %v402
          %v1493 = vpop.permute.xlu0 %1492
          %1496 = vset.pattern.permute.xlu0 0
          %1497 = vperm.xlu0 %1496, %v403
          %v1498 = vpop.permute.xlu0 %1497
          %1501 = vset.pattern.permute.xlu0 0
          %1502 = vperm.xlu0 %1501, %v404
          %v1503 = vpop.permute.xlu0 %1502
          %1506 = vset.pattern.permute.xlu0 0
          %1507 = vperm.xlu0 %1506, %v405
          %v1508 = vpop.permute.xlu0 %1507
          %1511 = vset.pattern.permute.xlu0 0
          %1512 = vperm.xlu0 %1511, %v406
          %v1513 = vpop.permute.xlu0 %1512
          %1516 = vset.pattern.permute.xlu0 0
          %1517 = vperm.xlu0 %1516, %v407
          %v1518 = vpop.permute.xlu0 %1517
          %1521 = vset.pattern.permute.xlu0 0
          %1522 = vperm.xlu0 %1521, %v408
          %v1523 = vpop.permute.xlu0 %1522
          %1526 = vset.pattern.permute.xlu0 0
          %1527 = vperm.xlu0 %1526, %v409
          %v1528 = vpop.permute.xlu0 %1527
          %1531 = vset.pattern.permute.xlu0 0
          %1532 = vperm.xlu0 %1531, %v410
          %v1533 = vpop.permute.xlu0 %1532
          %v1536 = vperm.slane %v378, 0
          %v1537 = vperm.slane %v378, 1
          %vm1540 = vcmp.gt.f32.partialorder %v1378, %v1536
          %vm1541 = vcmp.gt.f32.partialorder %v1378, %v1537
          %vm1542 = vcmp.gt.f32.partialorder %v1383, %v1536
          %vm1543 = vcmp.gt.f32.partialorder %v1383, %v1537
          %vm1544 = vcmp.gt.f32.partialorder %v1388, %v1536
          %vm1545 = vcmp.gt.f32.partialorder %v1388, %v1537
          %vm1546 = vcmp.gt.f32.partialorder %v1393, %v1536
          %vm1547 = vcmp.gt.f32.partialorder %v1393, %v1537
          %vm1548 = vcmp.gt.f32.partialorder %v1398, %v1536
          %vm1549 = vcmp.gt.f32.partialorder %v1398, %v1537
          %vm1550 = vcmp.gt.f32.partialorder %v1403, %v1536
          %vm1551 = vcmp.gt.f32.partialorder %v1403, %v1537
          %vm1552 = vcmp.gt.f32.partialorder %v1408, %v1536
          %vm1553 = vcmp.gt.f32.partialorder %v1408, %v1537
          %vm1554 = vcmp.gt.f32.partialorder %v1413, %v1536
          %vm1555 = vcmp.gt.f32.partialorder %v1413, %v1537
          %vm1556 = vcmp.gt.f32.partialorder %v1418, %v1536
          %vm1557 = vcmp.gt.f32.partialorder %v1418, %v1537
          %vm1558 = vcmp.gt.f32.partialorder %v1423, %v1536
          %vm1559 = vcmp.gt.f32.partialorder %v1423, %v1537
          %vm1560 = vcmp.gt.f32.partialorder %v1428, %v1536
          %vm1561 = vcmp.gt.f32.partialorder %v1428, %v1537
          %vm1562 = vcmp.gt.f32.partialorder %v1433, %v1536
          %vm1563 = vcmp.gt.f32.partialorder %v1433, %v1537
          %vm1564 = vcmp.gt.f32.partialorder %v1438, %v1536
          %vm1565 = vcmp.gt.f32.partialorder %v1438, %v1537
          %vm1566 = vcmp.gt.f32.partialorder %v1443, %v1536
          %vm1567 = vcmp.gt.f32.partialorder %v1443, %v1537
          %vm1568 = vcmp.gt.f32.partialorder %v1448, %v1536
          %vm1569 = vcmp.gt.f32.partialorder %v1448, %v1537
          %vm1570 = vcmp.gt.f32.partialorder %v1453, %v1536
          %vm1571 = vcmp.gt.f32.partialorder %v1453, %v1537
          %vm1572 = vcmp.gt.f32.partialorder %v1458, %v1536
          %vm1573 = vcmp.gt.f32.partialorder %v1458, %v1537
          %vm1574 = vcmp.gt.f32.partialorder %v1463, %v1536
          %vm1575 = vcmp.gt.f32.partialorder %v1463, %v1537
          %vm1576 = vcmp.gt.f32.partialorder %v1468, %v1536
          %vm1577 = vcmp.gt.f32.partialorder %v1468, %v1537
          %vm1578 = vcmp.gt.f32.partialorder %v1473, %v1536
          %vm1579 = vcmp.gt.f32.partialorder %v1473, %v1537
          %vm1580 = vcmp.gt.f32.partialorder %v1478, %v1536
          %vm1581 = vcmp.gt.f32.partialorder %v1478, %v1537
          %vm1582 = vcmp.gt.f32.partialorder %v1483, %v1536
          %vm1583 = vcmp.gt.f32.partialorder %v1483, %v1537
          %vm1584 = vcmp.gt.f32.partialorder %v1488, %v1536
          %vm1585 = vcmp.gt.f32.partialorder %v1488, %v1537
          %vm1586 = vcmp.gt.f32.partialorder %v1493, %v1536
          %vm1587 = vcmp.gt.f32.partialorder %v1493, %v1537
          %vm1588 = vcmp.gt.f32.partialorder %v1498, %v1536
          %vm1589 = vcmp.gt.f32.partialorder %v1498, %v1537
          %vm1590 = vcmp.gt.f32.partialorder %v1503, %v1536
          %vm1591 = vcmp.gt.f32.partialorder %v1503, %v1537
          %vm1592 = vcmp.gt.f32.partialorder %v1508, %v1536
          %vm1593 = vcmp.gt.f32.partialorder %v1508, %v1537
          %vm1594 = vcmp.gt.f32.partialorder %v1513, %v1536
          %vm1595 = vcmp.gt.f32.partialorder %v1513, %v1537
          %vm1596 = vcmp.gt.f32.partialorder %v1518, %v1536
          %vm1597 = vcmp.gt.f32.partialorder %v1518, %v1537
          %vm1598 = vcmp.gt.f32.partialorder %v1523, %v1536
          %vm1599 = vcmp.gt.f32.partialorder %v1523, %v1537
          %vm1600 = vcmp.gt.f32.partialorder %v1528, %v1536
          %vm1601 = vcmp.gt.f32.partialorder %v1528, %v1537
          %vm1602 = vcmp.gt.f32.partialorder %v1533, %v1536
          %vm1603 = vcmp.gt.f32.partialorder %v1533, %v1537
          %vm1604 = vcmp.eq.f32.partialorder %v1378, %v1536
          %vm1605 = vcmp.eq.f32.partialorder %v1378, %v1537
          %vm1606 = vcmp.eq.f32.partialorder %v1383, %v1536
          %vm1607 = vcmp.eq.f32.partialorder %v1383, %v1537
          %vm1608 = vcmp.eq.f32.partialorder %v1388, %v1536
          %vm1609 = vcmp.eq.f32.partialorder %v1388, %v1537
          %vm1610 = vcmp.eq.f32.partialorder %v1393, %v1536
          %vm1611 = vcmp.eq.f32.partialorder %v1393, %v1537
          %vm1612 = vcmp.eq.f32.partialorder %v1398, %v1536
          %vm1613 = vcmp.eq.f32.partialorder %v1398, %v1537
          %vm1614 = vcmp.eq.f32.partialorder %v1403, %v1536
          %vm1615 = vcmp.eq.f32.partialorder %v1403, %v1537
          %vm1616 = vcmp.eq.f32.partialorder %v1408, %v1536
          %vm1617 = vcmp.eq.f32.partialorder %v1408, %v1537
          %vm1618 = vcmp.eq.f32.partialorder %v1413, %v1536
          %vm1619 = vcmp.eq.f32.partialorder %v1413, %v1537
          %vm1620 = vcmp.eq.f32.partialorder %v1418, %v1536
          %vm1621 = vcmp.eq.f32.partialorder %v1418, %v1537
          %vm1622 = vcmp.eq.f32.partialorder %v1423, %v1536
          %vm1623 = vcmp.eq.f32.partialorder %v1423, %v1537
          %vm1624 = vcmp.eq.f32.partialorder %v1428, %v1536
          %vm1625 = vcmp.eq.f32.partialorder %v1428, %v1537
          %vm1626 = vcmp.eq.f32.partialorder %v1433, %v1536
          %vm1627 = vcmp.eq.f32.partialorder %v1433, %v1537
          %vm1628 = vcmp.eq.f32.partialorder %v1438, %v1536
          %vm1629 = vcmp.eq.f32.partialorder %v1438, %v1537
          %vm1630 = vcmp.eq.f32.partialorder %v1443, %v1536
          %vm1631 = vcmp.eq.f32.partialorder %v1443, %v1537
          %vm1632 = vcmp.eq.f32.partialorder %v1448, %v1536
          %vm1633 = vcmp.eq.f32.partialorder %v1448, %v1537
          %vm1634 = vcmp.eq.f32.partialorder %v1453, %v1536
          %vm1635 = vcmp.eq.f32.partialorder %v1453, %v1537
          %vm1636 = vcmp.eq.f32.partialorder %v1458, %v1536
          %vm1637 = vcmp.eq.f32.partialorder %v1458, %v1537
          %vm1638 = vcmp.eq.f32.partialorder %v1463, %v1536
          %vm1639 = vcmp.eq.f32.partialorder %v1463, %v1537
          %vm1640 = vcmp.eq.f32.partialorder %v1468, %v1536
          %vm1641 = vcmp.eq.f32.partialorder %v1468, %v1537
          %vm1642 = vcmp.eq.f32.partialorder %v1473, %v1536
          %vm1643 = vcmp.eq.f32.partialorder %v1473, %v1537
          %vm1644 = vcmp.eq.f32.partialorder %v1478, %v1536
          %vm1645 = vcmp.eq.f32.partialorder %v1478, %v1537
          %vm1646 = vcmp.eq.f32.partialorder %v1483, %v1536
          %vm1647 = vcmp.eq.f32.partialorder %v1483, %v1537
          %vm1648 = vcmp.eq.f32.partialorder %v1488, %v1536
          %vm1649 = vcmp.eq.f32.partialorder %v1488, %v1537
          %vm1650 = vcmp.eq.f32.partialorder %v1493, %v1536
          %vm1651 = vcmp.eq.f32.partialorder %v1493, %v1537
          %vm1652 = vcmp.eq.f32.partialorder %v1498, %v1536
          %vm1653 = vcmp.eq.f32.partialorder %v1498, %v1537
          %vm1654 = vcmp.eq.f32.partialorder %v1503, %v1536
          %vm1655 = vcmp.eq.f32.partialorder %v1503, %v1537
          %vm1656 = vcmp.eq.f32.partialorder %v1508, %v1536
          %vm1657 = vcmp.eq.f32.partialorder %v1508, %v1537
          %vm1658 = vcmp.eq.f32.partialorder %v1513, %v1536
          %vm1659 = vcmp.eq.f32.partialorder %v1513, %v1537
          %vm1660 = vcmp.eq.f32.partialorder %v1518, %v1536
          %vm1661 = vcmp.eq.f32.partialorder %v1518, %v1537
          %vm1662 = vcmp.eq.f32.partialorder %v1523, %v1536
          %vm1663 = vcmp.eq.f32.partialorder %v1523, %v1537
          %vm1664 = vcmp.eq.f32.partialorder %v1528, %v1536
          %vm1665 = vcmp.eq.f32.partialorder %v1528, %v1537
          %vm1666 = vcmp.eq.f32.partialorder %v1533, %v1536
          %vm1667 = vcmp.eq.f32.partialorder %v1533, %v1537
          %vm1668 = vcmp.lt.s32.totalorder %v413, %v1373
          %vm1669 = vcmp.lt.s32.totalorder %v413, %v1374
          %vm1670 = vcmp.lt.s32.totalorder %v1341, %v1373
          %vm1671 = vcmp.lt.s32.totalorder %v1341, %v1374
          %vm1672 = vcmp.lt.s32.totalorder %v1342, %v1373
          %vm1673 = vcmp.lt.s32.totalorder %v1342, %v1374
          %vm1674 = vcmp.lt.s32.totalorder %v1343, %v1373
          %vm1675 = vcmp.lt.s32.totalorder %v1343, %v1374
          %vm1676 = vcmp.lt.s32.totalorder %v1344, %v1373
          %vm1677 = vcmp.lt.s32.totalorder %v1344, %v1374
          %vm1678 = vcmp.lt.s32.totalorder %v1345, %v1373
          %vm1679 = vcmp.lt.s32.totalorder %v1345, %v1374
          %vm1680 = vcmp.lt.s32.totalorder %v1346, %v1373
          %vm1681 = vcmp.lt.s32.totalorder %v1346, %v1374
          %vm1682 = vcmp.lt.s32.totalorder %v1347, %v1373
          %vm1683 = vcmp.lt.s32.totalorder %v1347, %v1374
          %vm1684 = vcmp.lt.s32.totalorder %v1348, %v1373
          %vm1685 = vcmp.lt.s32.totalorder %v1348, %v1374
          %vm1686 = vcmp.lt.s32.totalorder %v1349, %v1373
          %vm1687 = vcmp.lt.s32.totalorder %v1349, %v1374
          %vm1688 = vcmp.lt.s32.totalorder %v1350, %v1373
          %vm1689 = vcmp.lt.s32.totalorder %v1350, %v1374
          %vm1690 = vcmp.lt.s32.totalorder %v1351, %v1373
          %vm1691 = vcmp.lt.s32.totalorder %v1351, %v1374
          %vm1692 = vcmp.lt.s32.totalorder %v1352, %v1373
          %vm1693 = vcmp.lt.s32.totalorder %v1352, %v1374
          %vm1694 = vcmp.lt.s32.totalorder %v1353, %v1373
          %vm1695 = vcmp.lt.s32.totalorder %v1353, %v1374
          %vm1696 = vcmp.lt.s32.totalorder %v1354, %v1373
          %vm1697 = vcmp.lt.s32.totalorder %v1354, %v1374
          %vm1698 = vcmp.lt.s32.totalorder %v1355, %v1373
          %vm1699 = vcmp.lt.s32.totalorder %v1355, %v1374
          %vm1700 = vcmp.lt.s32.totalorder %v1356, %v1373
          %vm1701 = vcmp.lt.s32.totalorder %v1356, %v1374
          %vm1702 = vcmp.lt.s32.totalorder %v1357, %v1373
          %vm1703 = vcmp.lt.s32.totalorder %v1357, %v1374
          %vm1704 = vcmp.lt.s32.totalorder %v1358, %v1373
          %vm1705 = vcmp.lt.s32.totalorder %v1358, %v1374
          %vm1706 = vcmp.lt.s32.totalorder %v1359, %v1373
          %vm1707 = vcmp.lt.s32.totalorder %v1359, %v1374
          %vm1708 = vcmp.lt.s32.totalorder %v1360, %v1373
          %vm1709 = vcmp.lt.s32.totalorder %v1360, %v1374
          %vm1710 = vcmp.lt.s32.totalorder %v1361, %v1373
          %vm1711 = vcmp.lt.s32.totalorder %v1361, %v1374
          %vm1712 = vcmp.lt.s32.totalorder %v1362, %v1373
          %vm1713 = vcmp.lt.s32.totalorder %v1362, %v1374
          %vm1714 = vcmp.lt.s32.totalorder %v1363, %v1373
          %vm1715 = vcmp.lt.s32.totalorder %v1363, %v1374
          %vm1716 = vcmp.lt.s32.totalorder %v1364, %v1373
          %vm1717 = vcmp.lt.s32.totalorder %v1364, %v1374
          %vm1718 = vcmp.lt.s32.totalorder %v1365, %v1373
          %vm1719 = vcmp.lt.s32.totalorder %v1365, %v1374
          %vm1720 = vcmp.lt.s32.totalorder %v1366, %v1373
          %vm1721 = vcmp.lt.s32.totalorder %v1366, %v1374
          %vm1722 = vcmp.lt.s32.totalorder %v1367, %v1373
          %vm1723 = vcmp.lt.s32.totalorder %v1367, %v1374
          %vm1724 = vcmp.lt.s32.totalorder %v1368, %v1373
          %vm1725 = vcmp.lt.s32.totalorder %v1368, %v1374
          %vm1726 = vcmp.lt.s32.totalorder %v1369, %v1373
          %vm1727 = vcmp.lt.s32.totalorder %v1369, %v1374
          %vm1728 = vcmp.lt.s32.totalorder %v1370, %v1373
          %vm1729 = vcmp.lt.s32.totalorder %v1370, %v1374
          %vm1730 = vcmp.lt.s32.totalorder %v1371, %v1373
          %vm1731 = vcmp.lt.s32.totalorder %v1371, %v1374
          %vm1732 = vmand %vm1604, %vm1668
          %vm1733 = vmand %vm1605, %vm1669
          %vm1734 = vmand %vm1606, %vm1670
          %vm1735 = vmand %vm1607, %vm1671
          %vm1736 = vmand %vm1608, %vm1672
          %vm1737 = vmand %vm1609, %vm1673
          %vm1738 = vmand %vm1610, %vm1674
          %vm1739 = vmand %vm1611, %vm1675
          %vm1740 = vmand %vm1612, %vm1676
          %vm1741 = vmand %vm1613, %vm1677
          %vm1742 = vmand %vm1614, %vm1678
          %vm1743 = vmand %vm1615, %vm1679
          %vm1744 = vmand %vm1616, %vm1680
          %vm1745 = vmand %vm1617, %vm1681
          %vm1746 = vmand %vm1618, %vm1682
          %vm1747 = vmand %vm1619, %vm1683
          %vm1748 = vmand %vm1620, %vm1684
          %vm1749 = vmand %vm1621, %vm1685
          %vm1750 = vmand %vm1622, %vm1686
          %vm1751 = vmand %vm1623, %vm1687
          %vm1752 = vmand %vm1624, %vm1688
          %vm1753 = vmand %vm1625, %vm1689
          %vm1754 = vmand %vm1626, %vm1690
          %vm1755 = vmand %vm1627, %vm1691
          %vm1756 = vmand %vm1628, %vm1692
          %vm1757 = vmand %vm1629, %vm1693
          %vm1758 = vmand %vm1630, %vm1694
          %vm1759 = vmand %vm1631, %vm1695
          %vm1760 = vmand %vm1632, %vm1696
          %vm1761 = vmand %vm1633, %vm1697
          %vm1762 = vmand %vm1634, %vm1698
          %vm1763 = vmand %vm1635, %vm1699
          %vm1764 = vmand %vm1636, %vm1700
          %vm1765 = vmand %vm1637, %vm1701
          %vm1766 = vmand %vm1638, %vm1702
          %vm1767 = vmand %vm1639, %vm1703
          %vm1768 = vmand %vm1640, %vm1704
          %vm1769 = vmand %vm1641, %vm1705
          %vm1770 = vmand %vm1642, %vm1706
          %vm1771 = vmand %vm1643, %vm1707
          %vm1772 = vmand %vm1644, %vm1708
          %vm1773 = vmand %vm1645, %vm1709
          %vm1774 = vmand %vm1646, %vm1710
          %vm1775 = vmand %vm1647, %vm1711
          %vm1776 = vmand %vm1648, %vm1712
          %vm1777 = vmand %vm1649, %vm1713
          %vm1778 = vmand %vm1650, %vm1714
          %vm1779 = vmand %vm1651, %vm1715
          %vm1780 = vmand %vm1652, %vm1716
          %vm1781 = vmand %vm1653, %vm1717
          %vm1782 = vmand %vm1654, %vm1718
          %vm1783 = vmand %vm1655, %vm1719
          %vm1784 = vmand %vm1656, %vm1720
          %vm1785 = vmand %vm1657, %vm1721
          %vm1786 = vmand %vm1658, %vm1722
          %vm1787 = vmand %vm1659, %vm1723
          %vm1788 = vmand %vm1660, %vm1724
          %vm1789 = vmand %vm1661, %vm1725
          %vm1790 = vmand %vm1662, %vm1726
          %vm1791 = vmand %vm1663, %vm1727
          %vm1792 = vmand %vm1664, %vm1728
          %vm1793 = vmand %vm1665, %vm1729
          %vm1794 = vmand %vm1666, %vm1730
          %vm1795 = vmand %vm1667, %vm1731
          %vm1796 = vmor %vm1540, %vm1732
          %vm1797 = vmor %vm1541, %vm1733
          %vm1798 = vmor %vm1542, %vm1734
          %vm1799 = vmor %vm1543, %vm1735
          %vm1800 = vmor %vm1544, %vm1736
          %vm1801 = vmor %vm1545, %vm1737
          %vm1802 = vmor %vm1546, %vm1738
          %vm1803 = vmor %vm1547, %vm1739
          %vm1804 = vmor %vm1548, %vm1740
          %vm1805 = vmor %vm1549, %vm1741
          %vm1806 = vmor %vm1550, %vm1742
          %vm1807 = vmor %vm1551, %vm1743
          %vm1808 = vmor %vm1552, %vm1744
          %vm1809 = vmor %vm1553, %vm1745
          %vm1810 = vmor %vm1554, %vm1746
          %vm1811 = vmor %vm1555, %vm1747
          %vm1812 = vmor %vm1556, %vm1748
          %vm1813 = vmor %vm1557, %vm1749
          %vm1814 = vmor %vm1558, %vm1750
          %vm1815 = vmor %vm1559, %vm1751
          %vm1816 = vmor %vm1560, %vm1752
          %vm1817 = vmor %vm1561, %vm1753
          %vm1818 = vmor %vm1562, %vm1754
          %vm1819 = vmor %vm1563, %vm1755
          %vm1820 = vmor %vm1564, %vm1756
          %vm1821 = vmor %vm1565, %vm1757
          %vm1822 = vmor %vm1566, %vm1758
          %vm1823 = vmor %vm1567, %vm1759
          %vm1824 = vmor %vm1568, %vm1760
          %vm1825 = vmor %vm1569, %vm1761
          %vm1826 = vmor %vm1570, %vm1762
          %vm1827 = vmor %vm1571, %vm1763
          %vm1828 = vmor %vm1572, %vm1764
          %vm1829 = vmor %vm1573, %vm1765
          %vm1830 = vmor %vm1574, %vm1766
          %vm1831 = vmor %vm1575, %vm1767
          %vm1832 = vmor %vm1576, %vm1768
          %vm1833 = vmor %vm1577, %vm1769
          %vm1834 = vmor %vm1578, %vm1770
          %vm1835 = vmor %vm1579, %vm1771
          %vm1836 = vmor %vm1580, %vm1772
          %vm1837 = vmor %vm1581, %vm1773
          %vm1838 = vmor %vm1582, %vm1774
          %vm1839 = vmor %vm1583, %vm1775
          %vm1840 = vmor %vm1584, %vm1776
          %vm1841 = vmor %vm1585, %vm1777
          %vm1842 = vmor %vm1586, %vm1778
          %vm1843 = vmor %vm1587, %vm1779
          %vm1844 = vmor %vm1588, %vm1780
          %vm1845 = vmor %vm1589, %vm1781
          %vm1846 = vmor %vm1590, %vm1782
          %vm1847 = vmor %vm1591, %vm1783
          %vm1848 = vmor %vm1592, %vm1784
          %vm1849 = vmor %vm1593, %vm1785
          %vm1850 = vmor %vm1594, %vm1786
          %vm1851 = vmor %vm1595, %vm1787
          %vm1852 = vmor %vm1596, %vm1788
          %vm1853 = vmor %vm1597, %vm1789
          %vm1854 = vmor %vm1598, %vm1790
          %vm1855 = vmor %vm1599, %vm1791
          %vm1856 = vmor %vm1600, %vm1792
          %vm1857 = vmor %vm1601, %vm1793
          %vm1858 = vmor %vm1602, %vm1794
          %vm1859 = vmor %vm1603, %vm1795
          %v1860 = vsel %vm1796, 1, 0
          %v1861 = vsel %vm1797, 1, 0
          %v1862 = vsel %vm1798, 1, 0
          %v1863 = vsel %vm1799, 1, 0
          %v1864 = vsel %vm1800, 1, 0
          %v1865 = vsel %vm1801, 1, 0
          %v1866 = vsel %vm1802, 1, 0
          %v1867 = vsel %vm1803, 1, 0
          %v1868 = vsel %vm1804, 1, 0
          %v1869 = vsel %vm1805, 1, 0
          %v1870 = vsel %vm1806, 1, 0
          %v1871 = vsel %vm1807, 1, 0
          %v1872 = vsel %vm1808, 1, 0
          %v1873 = vsel %vm1809, 1, 0
          %v1874 = vsel %vm1810, 1, 0
          %v1875 = vsel %vm1811, 1, 0
          %v1876 = vsel %vm1812, 1, 0
          %v1877 = vsel %vm1813, 1, 0
          %v1878 = vsel %vm1814, 1, 0
          %v1879 = vsel %vm1815, 1, 0
          %v1880 = vsel %vm1816, 1, 0
          %v1881 = vsel %vm1817, 1, 0
          %v1882 = vsel %vm1818, 1, 0
          %v1883 = vsel %vm1819, 1, 0
          %v1884 = vsel %vm1820, 1, 0
          %v1885 = vsel %vm1821, 1, 0
          %v1886 = vsel %vm1822, 1, 0
          %v1887 = vsel %vm1823, 1, 0
          %v1888 = vsel %vm1824, 1, 0
          %v1889 = vsel %vm1825, 1, 0
          %v1890 = vsel %vm1826, 1, 0
          %v1891 = vsel %vm1827, 1, 0
          %v1892 = vsel %vm1828, 1, 0
          %v1893 = vsel %vm1829, 1, 0
          %v1894 = vsel %vm1830, 1, 0
          %v1895 = vsel %vm1831, 1, 0
          %v1896 = vsel %vm1832, 1, 0
          %v1897 = vsel %vm1833, 1, 0
          %v1898 = vsel %vm1834, 1, 0
          %v1899 = vsel %vm1835, 1, 0
          %v1900 = vsel %vm1836, 1, 0
          %v1901 = vsel %vm1837, 1, 0
          %v1902 = vsel %vm1838, 1, 0
          %v1903 = vsel %vm1839, 1, 0
          %v1904 = vsel %vm1840, 1, 0
          %v1905 = vsel %vm1841, 1, 0
          %v1906 = vsel %vm1842, 1, 0
          %v1907 = vsel %vm1843, 1, 0
          %v1908 = vsel %vm1844, 1, 0
          %v1909 = vsel %vm1845, 1, 0
          %v1910 = vsel %vm1846, 1, 0
          %v1911 = vsel %vm1847, 1, 0
          %v1912 = vsel %vm1848, 1, 0
          %v1913 = vsel %vm1849, 1, 0
          %v1914 = vsel %vm1850, 1, 0
          %v1915 = vsel %vm1851, 1, 0
          %v1916 = vsel %vm1852, 1, 0
          %v1917 = vsel %vm1853, 1, 0
          %v1918 = vsel %vm1854, 1, 0
          %v1919 = vsel %vm1855, 1, 0
          %v1920 = vsel %vm1856, 1, 0
          %v1921 = vsel %vm1857, 1, 0
          %v1922 = vsel %vm1858, 1, 0
          %v1923 = vsel %vm1859, 1, 0
          %v1924 = vcvt.s32.f32 %v1860
          %v1925 = vcvt.s32.f32 %v1861
          %v1926 = vcvt.s32.f32 %v1862
          %v1927 = vcvt.s32.f32 %v1863
          %v1928 = vcvt.s32.f32 %v1864
          %v1929 = vcvt.s32.f32 %v1865
          %v1930 = vcvt.s32.f32 %v1866
          %v1931 = vcvt.s32.f32 %v1867
          %v1932 = vcvt.s32.f32 %v1868
          %v1933 = vcvt.s32.f32 %v1869
          %v1934 = vcvt.s32.f32 %v1870
          %v1935 = vcvt.s32.f32 %v1871
          %v1936 = vcvt.s32.f32 %v1872
          %v1937 = vcvt.s32.f32 %v1873
          %v1938 = vcvt.s32.f32 %v1874
          %v1939 = vcvt.s32.f32 %v1875
          %v1940 = vcvt.s32.f32 %v1876
          %v1941 = vcvt.s32.f32 %v1877
          %v1942 = vcvt.s32.f32 %v1878
          %v1943 = vcvt.s32.f32 %v1879
          %v1944 = vcvt.s32.f32 %v1880
          %v1945 = vcvt.s32.f32 %v1881
          %v1946 = vcvt.s32.f32 %v1882
          %v1947 = vcvt.s32.f32 %v1883
          %v1948 = vcvt.s32.f32 %v1884
          %v1949 = vcvt.s32.f32 %v1885
          %v1950 = vcvt.s32.f32 %v1886
          %v1951 = vcvt.s32.f32 %v1887
          %v1952 = vcvt.s32.f32 %v1888
          %v1953 = vcvt.s32.f32 %v1889
          %v1954 = vcvt.s32.f32 %v1890
          %v1955 = vcvt.s32.f32 %v1891
          %v1956 = vcvt.s32.f32 %v1892
          %v1957 = vcvt.s32.f32 %v1893
          %v1958 = vcvt.s32.f32 %v1894
          %v1959 = vcvt.s32.f32 %v1895
          %v1960 = vcvt.s32.f32 %v1896
          %v1961 = vcvt.s32.f32 %v1897
          %v1962 = vcvt.s32.f32 %v1898
          %v1963 = vcvt.s32.f32 %v1899
          %v1964 = vcvt.s32.f32 %v1900
          %v1965 = vcvt.s32.f32 %v1901
          %v1966 = vcvt.s32.f32 %v1902
          %v1967 = vcvt.s32.f32 %v1903
          %v1968 = vcvt.s32.f32 %v1904
          %v1969 = vcvt.s32.f32 %v1905
          %v1970 = vcvt.s32.f32 %v1906
          %v1971 = vcvt.s32.f32 %v1907
          %v1972 = vcvt.s32.f32 %v1908
          %v1973 = vcvt.s32.f32 %v1909
          %v1974 = vcvt.s32.f32 %v1910
          %v1975 = vcvt.s32.f32 %v1911
          %v1976 = vcvt.s32.f32 %v1912
          %v1977 = vcvt.s32.f32 %v1913
          %v1978 = vcvt.s32.f32 %v1914
          %v1979 = vcvt.s32.f32 %v1915
          %v1980 = vcvt.s32.f32 %v1916
          %v1981 = vcvt.s32.f32 %v1917
          %v1982 = vcvt.s32.f32 %v1918
          %v1983 = vcvt.s32.f32 %v1919
          %v1984 = vcvt.s32.f32 %v1920
          %v1985 = vcvt.s32.f32 %v1921
          %v1986 = vcvt.s32.f32 %v1922
          %v1987 = vcvt.s32.f32 %v1923
          %v1988 = vpack.c.bf16 %v1926, %v1924
          %v1989 = vpack.c.bf16 %v1927, %v1925
          %v1990 = vpack.c.bf16 %v1930, %v1928
          %v1991 = vpack.c.bf16 %v1931, %v1929
          %v1992 = vpack.c.bf16 %v1934, %v1932
          %v1993 = vpack.c.bf16 %v1935, %v1933
          %v1994 = vpack.c.bf16 %v1938, %v1936
          %v1995 = vpack.c.bf16 %v1939, %v1937
          %v1996 = vpack.c.bf16 %v1942, %v1940
          %v1997 = vpack.c.bf16 %v1943, %v1941
          %v1998 = vpack.c.bf16 %v1946, %v1944
          %v1999 = vpack.c.bf16 %v1947, %v1945
          %v2000 = vpack.c.bf16 %v1950, %v1948
          %v2001 = vpack.c.bf16 %v1951, %v1949
          %v2002 = vpack.c.bf16 %v1954, %v1952
          %v2003 = vpack.c.bf16 %v1955, %v1953
          %v2004 = vpack.c.bf16 %v1958, %v1956
          %v2005 = vpack.c.bf16 %v1959, %v1957
          %v2006 = vpack.c.bf16 %v1962, %v1960
          %v2007 = vpack.c.bf16 %v1963, %v1961
          %v2008 = vpack.c.bf16 %v1966, %v1964
          %v2009 = vpack.c.bf16 %v1967, %v1965
          %v2010 = vpack.c.bf16 %v1970, %v1968
          %v2011 = vpack.c.bf16 %v1971, %v1969
          %v2012 = vpack.c.bf16 %v1974, %v1972
          %v2013 = vpack.c.bf16 %v1975, %v1973
          %v2014 = vpack.c.bf16 %v1978, %v1976
          %v2015 = vpack.c.bf16 %v1979, %v1977
          %v2016 = vpack.c.bf16 %v1982, %v1980
          %v2017 = vpack.c.bf16 %v1983, %v1981
          %v2018 = vpack.c.bf16 %v1986, %v1984
          %v2019 = vpack.c.bf16 %v1987, %v1985
          %2020 = vmatpush.bf16.msra.mxu0 %v2002
          %2021 = vmatpush.bf16.msra.mxu0 %v2000
          %2022 = vmatpush.bf16.msra.mxu0 %v1998
          %2023 = vmatpush.bf16.msra.mxu0 %v1996
          %2024 = vmatpush.bf16.msra.mxu0 %v1994
          %2025 = vmatpush.bf16.msra.mxu0 %v1992
          %2026 = vmatpush.bf16.msra.mxu0 %v1990
          %2027 = vmatpush.bf16.msra.mxu0 %v1988
          %2028 = vmatmul.bf16.gmra.mxu0 %v427
          %v2029 = vpop.f32.mrf.mxu0
          %v2030 = vadd.f32 0.0, %v2029
          %v2031 = vpop.f32.mrf.mxu0
          %2032 = vdwg.mxu0
          %2033 = vmatpush.bf16.msra.mxu0 %v2018
          %2034 = vmatpush.bf16.msra.mxu0 %v2016
          %2035 = vmatpush.bf16.msra.mxu0 %v2014
          %2036 = vmatpush.bf16.msra.mxu0 %v2012
          %2037 = vmatpush.bf16.msra.mxu0 %v2010
          %2038 = vmatpush.bf16.msra.mxu0 %v2008
          %2039 = vmatpush.bf16.msra.mxu0 %v2006
          %2040 = vmatpush.bf16.msra.mxu0 %v2004
          %2041 = vmatmul.bf16.gmra.mxu0 %v428
          %v2042 = vpop.f32.mrf.mxu0
          %v2043 = vadd.f32 %v2030, %v2042
          %v2044 = vpop.f32.mrf.mxu0
          %2045 = vdwg.mxu0
          %2046 = vmatpush.bf16.msra.mxu0 %v2003
          %2047 = vmatpush.bf16.msra.mxu0 %v2001
          %2048 = vmatpush.bf16.msra.mxu0 %v1999
          %2049 = vmatpush.bf16.msra.mxu0 %v1997
          %2050 = vmatpush.bf16.msra.mxu0 %v1995
          %2051 = vmatpush.bf16.msra.mxu0 %v1993
          %2052 = vmatpush.bf16.msra.mxu0 %v1991
          %2053 = vmatpush.bf16.msra.mxu0 %v1989
          %2054 = vmatmul.bf16.gmra.mxu0 %v427
          %v2055 = vpop.f32.mrf.mxu0
          %v2056 = vadd.f32 0.0, %v2055
          %v2057 = vpop.f32.mrf.mxu0
          %2058 = vdwg.mxu0
          %2059 = vmatpush.bf16.msra.mxu0 %v2019
          %2060 = vmatpush.bf16.msra.mxu0 %v2017
          %2061 = vmatpush.bf16.msra.mxu0 %v2015
          %2062 = vmatpush.bf16.msra.mxu0 %v2013
          %2063 = vmatpush.bf16.msra.mxu0 %v2011
          %2064 = vmatpush.bf16.msra.mxu0 %v2009
          %2065 = vmatpush.bf16.msra.mxu0 %v2007
          %2066 = vmatpush.bf16.msra.mxu0 %v2005
          %2067 = vmatmul.bf16.gmra.mxu0 %v428
          %v2068 = vpop.f32.mrf.mxu0
          %v2069 = vadd.f32 %v2056, %v2068
          %v2070 = vpop.f32.mrf.mxu0
          %2071 = vdwg.mxu0
          %v2072 = vld [vmem:[#allocation2] sm:$0xf]
          %v2075 = vrot.slane %v2069, 6
          %vm2076 = vcmask 1041408
          %v2077 = vsel %vm2076, %v2043, %v2075
          %v2079 = vadd.f32 %v2072, %v2077
          %2080 = vst [vmem:[#allocation2] sm:$0xf] %v2079
        $region56: #{tpu_custom_call.1} parent=39 // pred_fallthru
          _
        // Predicated region
        $region57: #{tpu_custom_call.1} parent=39 // pred_check
          %p2081 = pneg %p373
        $region58: #{tpu_custom_call.1} parent=39 // pred_check_branch
          %2083 = sbr.rel (%p2081) target = $region60
        $region59: #{tpu_custom_call.1} parent=39 // pred_region
          %v2084 = vld [vmem:[%s372] sm:$0x1]
          %v2085 = vld [vmem:[%s349] sm:$0x3]
          %v2086 = vld [vmem:[%s340] sm:$0x3]
          %v2087 = vld [vmem:[#allocation2] ss:$2 sm:$0x3]
          %s2088 = scalar_lea.vmem [#allocation2], 1
          %v2089 = vld [vmem:[%s2088] ss:$2 sm:$0x3]
          %v2090 = vadd.f32 %v2087, %v2085
          %v2091 = vsub.f32 1.0, %v2085
          %v2092 = vadd.f32 %v2089, %v2091
          %2094 = vset.pattern.permute.xlu0 0
          %2095 = vperm.xlu0 %2094, %v2084
          %v2096 = vpop.permute.xlu0 %2095
          %v2098 = vperm.slane %v2096, 0
          %v2099 = vadd.f32 %v2098, %v2092
          %v2100 = vsub.f32 %v2098, %v2090
          %v2101 = vrcp.pop %v2099
          %v2102 = vmul.f32 %v2099, %v2101
          %v2103 = vsub.f32 1.0, %v2102
          %v2104 = vmul.f32 %v2101, %v2103
          %v2105 = vadd.f32 %v2101, %v2104
          %vm2106 = vweird.f32 %v2099
          %vm2107 = vweird.f32 %v2101
          %vm2108 = vmor %vm2106, %vm2107
          %v2109 = vsel %vm2108, %v2101, %v2105
          %v2110 = vand.u32 2147483647, %v2099
          %vm2111 = vcmp.eq.f32.partialorder %v2110, 8.507059e+37
          %v2112 = vand.u32 %v2099, 2147483648
          %v2113 = vor.u32 1.1754944e-38, %v2112
          %v2114 = vsel %vm2111, %v2113, %v2109
          %v2115 = vmul.f32 %v2100, %v2114
          %v2116 = vsub.f32 1.0, %v2115
          %v2117 = vadd.f32 %v2098, %v2089
          %vm2118 = vcmp.gt.f32.partialorder %v2117, 0.0
          %v2119 = vsub.f32 %v2098, %v2087
          %v2120 = vmax.f32 %v2117, 1.0
          %v2121 = vrcp.pop %v2120
          %v2122 = vmul.f32 %v2120, %v2121
          %v2123 = vsub.f32 1.0, %v2122
          %v2124 = vmul.f32 %v2121, %v2123
          %v2125 = vadd.f32 %v2121, %v2124
          %vm2126 = vweird.f32 %v2120
          %vm2127 = vweird.f32 %v2121
          %vm2128 = vmor %vm2126, %vm2127
          %v2129 = vsel %vm2128, %v2121, %v2125
          %v2130 = vand.u32 2147483647, %v2120
          %vm2131 = vcmp.eq.f32.partialorder %v2130, 8.507059e+37
          %v2132 = vand.u32 %v2120, 2147483648
          %v2133 = vor.u32 1.1754944e-38, %v2132
          %v2134 = vsel %vm2131, %v2133, %v2129
          %v2135 = vmul.f32 %v2119, %v2134
          %v2136 = vsub.f32 1.0, %v2135
          %v2137 = vsel %vm2118, %v2136, 0.0
          %v2138 = vsub.f32 %v2116, %v2137
          %v2139 = vmax.f32 %v2086, 0.0
          %v2140 = vmul.f32 %v2139, %v2138
          %v2142 = vperm.slane %v2140, 0
          %v2143 = vperm.slane %v2140, 1
          %vm2146 = vcmask 1040384
          %v2147 = vsel %vm2146, %v2142, 0.0
          %v2148 = vsel %vm2146, %v2143, 0.0
          %v2149 = vadd.f32 %v2147, %v2148
          %2150 = vadd.xlane.f32.xlu0 %v2149
          %v2151 = vpop.xlane.xlu0 %2150
          %v2152 = vrot.slane %v2151, 4
          %v2153 = vadd.f32 %v2151, %v2152
          %v2154 = vrot.slane %v2153, 2
          %v2155 = vadd.f32 %v2153, %v2154
          %v2156 = vrot.slane %v2155, 1
          %v2157 = vadd.f32 %v2155, %v2156
          %s2158 = vtos %v2157
          %v2159 = vstv %s2158
          %2160 = vst [vmem:[%s332] sm:$0xff] %v2159
        $region60: #{tpu_custom_call.1} parent=39 // pred_fallthru
          _
        %s2161 = sand.u32 %s186, 1
        %s2162 = scalar_lea.sflag [#allocation4], %s2161
        %s2163 = sand.u32 %s186, 1
        %s2164 = smul.addr %s2163, 8
        %s2165 = scalar_lea.vmem [#allocation3], %s2164
        // Predicated region
        $region61: #{tpu_custom_call.1} parent=39 // pred_check
          %p2166 = pneg %p196
        $region62: #{tpu_custom_call.1} parent=39 // pred_check_branch
          %2168 = sbr.rel (%p2166) target = $region64
        $region63: #{tpu_custom_call.1} parent=39 // pred_region
          %2170 = vsyncadd %s2162, 0
          %s2171 = sadd.s32 %s25, %s24
          %s2172 = smul.addr %s2171, 8
          %s2173 = scalar_lea.hbm %s5, %s2172
          %s2175 = sshll.u32 %s2165, 4
          %s2176 = int_to_ptr.vmem [resolvable:$true] %s2175
          %s2177 = sshll.u32 %s2173, 4
          %s2178 = int_to_ptr.hbm [resolvable:$true] %s2177
          %2180 = dma.vmem_to_hbm [thread:$0]  %s2176, 128, %s2178, %s2162
        $region64: #{tpu_custom_call.1} parent=39 // pred_fallthru
          _
      $region40: #{tpu_custom_call.1} parent=5 // pred_fallthru
        _
      %p2181 = scmp.le.s32.totalorder 2, %s14
      // Predicated region
      $region65: #{tpu_custom_call.1} parent=5 // pred_check
        %p2182 = pneg %p2181
      $region66: #{tpu_custom_call.1} parent=5 // pred_check_branch
        %2184 = sbr.rel (%p2182) target = $region68
      $region67: #{tpu_custom_call.1} parent=5 // pred_region
        %s2185 = ssub.s32 %s14, 2
        // Predicated region
        $region69: #{tpu_custom_call.1} parent=67 // pred_check
          %p2186 = pneg %p202
        $region70: #{tpu_custom_call.1} parent=67 // pred_check_branch
          %2188 = sbr.rel (%p2186) target = $region72
        $region71: #{tpu_custom_call.1} parent=67 // pred_region
          %s2189 = sand.u32 %s187, 1
          %s2190 = scalar_lea.sflag [#allocation4], %s2189
          %s2191 = sand.u32 %s187, 1
          %s2192 = smul.addr %s2191, 8
          %s2193 = scalar_lea.vmem [#allocation3], %s2192
          %2195 = dma.done %s2190, 128
        $region72: #{tpu_custom_call.1} parent=67 // pred_fallthru
          _
      $region68: #{tpu_custom_call.1} parent=5 // pred_fallthru
        _
    $region6: #{tpu_custom_call.1} parent=1 // loop_footer
      %s18 = sadd.s32 1, %s14
    $region7: #{tpu_custom_call.1} parent=1 // loop_footer_branch
      %13 = sbr.rel target = $region3
    $region8: #{tpu_custom_call.1} parent=1 // loop_exit
      _
    %2196 = vsyncpa [#allocation4], 1
    %s2197 = scalar_lea.sflag [#allocation4], 1
    %2198 = vsyncpa %s2197, 1

</llo_original>
